<compile_context>
chip_gen: v7x
topology: tpu7x:2x2x1
jax: 0.10.0
libtpu: 0.0.40
codegen_flags: <defaults>
</compile_context>

<pallas_src>
import functools

import jax
import jax.numpy as jnp
from jax.experimental import pallas as pl
from jax.experimental.pallas import tpu as pltpu


def _lstm_fused_kernel(x_ref, wih_ref, bias_ref, whh_ref, h_out_ref, *,
                       seq_len, hidden_p):
    """Single-invocation fused LSTM (input projection + recurrence).

    x_ref:     (T, Bp, 1)  input sequence (input_size == 1), batch zero-padded
    wih_ref:   (1, 4*Hp)   input->gate weight row, gate-column zero-padded
    bias_ref:  (1, 4*Hp)   fused b_ih + b_hh, gate-column zero-padded
    whh_ref:   (Hp, 4*Hp)  recurrent weight, bf16, zero-padded, pre-transposed
    h_out_ref: (Bp, Hp)    final hidden state (lane-dense f32 output)
    """
    Hp = hidden_p
    Bp = h_out_ref.shape[0]

    def sigmoid1(v):
        # One EUP transcendental (tanh) instead of exp + divide.
        return 0.5 * jnp.tanh(0.5 * v) + 0.5

    def step(t, carry):
        h, c = carry
        # Fused input projection (I == 1): broadcast mul-add on the VPU,
        # off the serial MXU path.  Padded batch rows just pick up the bias
        # (harmless: batch rows never mix and are sliced off outside).
        pre_t = x_ref[t] * wih_ref[...] + bias_ref[...]              # (Bp, 4Hp)
        # Serial critical path: one (Bp,Hp)x(Hp,4Hp) bf16 MXU matmul, f32 acc.
        # W_hh is fed from VMEM each step — no 32/64-vreg value held live
        # across the unrolled steps.
        gates = pre_t + jnp.dot(h.astype(jnp.bfloat16), whh_ref[...],
                                preferred_element_type=jnp.float32)
        # PyTorch gate order i, f, g, o; each slice is a full 128-lane tile.
        i_g = sigmoid1(gates[:, 0 * Hp:1 * Hp])
        f_g = sigmoid1(gates[:, 1 * Hp:2 * Hp])
        g_g = jnp.tanh(gates[:, 2 * Hp:3 * Hp])
        o_g = sigmoid1(gates[:, 3 * Hp:4 * Hp])
        c_new = f_g * c + i_g * g_g
        h_new = o_g * jnp.tanh(c_new)
        return (h_new, c_new)

    h0 = jnp.zeros((Bp, Hp), jnp.float32)
    c0 = jnp.zeros((Bp, Hp), jnp.float32)
    # Fully unrolled: short fixed trip count gives the LLO scheduler visibility
    # across timesteps, and makes x_ref[t] a static index.
    h_last, _ = jax.lax.fori_loop(0, seq_len, step, (h0, c0), unroll=True)
    h_out_ref[...] = h_last


def _pad_gate_cols(w, H, Hp):
    """Zero-pad each of the 4 gate blocks of the trailing (4*H) axis to Hp."""
    lead = w.shape[:-1]
    w4 = w.reshape(*lead, 4, H)
    w4 = jnp.pad(w4, [(0, 0)] * len(lead) + [(0, 0), (0, Hp - H)])
    return w4.reshape(*lead, 4 * Hp)


def lstm_model_forward(x, params):
    """x: (B, T, 1) float32 -> (B, O) float32 (matches LSTMModel.forward)."""
    B, T, I = x.shape
    assert I == 1, "fused input projection path assumes input_size == 1"
    H = params["whh_t"].shape[0]

    # Pad hidden to a full 128-lane tile and batch to 8 sublanes (f32 vreg).
    LANE, SUBLANE = 128, 8
    Hp = ((H + LANE - 1) // LANE) * LANE
    Bp = ((B + SUBLANE - 1) // SUBLANE) * SUBLANE

    # Zero-padded weights: padded gate lanes get pre-activation 0 and padded
    # hidden rows of W_hh are zero, so hidden-lane padding never leaks.
    wih_p = _pad_gate_cols(params["wih_t"], H, Hp)                   # (1, 4Hp)
    whh_p = _pad_gate_cols(params["whh_t"], H, Hp)                   # (H, 4Hp)
    whh_p = jnp.pad(whh_p, ((0, Hp - H), (0, 0)))                    # (Hp, 4Hp)
    whh_p = whh_p.astype(jnp.bfloat16)                               # MXU-native
    bias_p = _pad_gate_cols(
        (params["b_ih"] + params["b_hh"])[None, :], H, Hp)           # (1, 4Hp)

    x_tb1 = jnp.transpose(x, (1, 0, 2))                              # (T, B, 1)
    x_tb1 = jnp.pad(x_tb1, ((0, 0), (0, Bp - B), (0, 0)))            # (T, Bp, 1)

    kernel = functools.partial(_lstm_fused_kernel, seq_len=T, hidden_p=Hp)

    h_last_p = pl.pallas_call(
        kernel,
        out_shape=jax.ShapeDtypeStruct((Bp, Hp), jnp.float32),
        # Single invocation, whole (tiny) operands VMEM-resident, no blocking.
        in_specs=[
            pl.BlockSpec(memory_space=pltpu.MemorySpace.VMEM),   # x (T,Bp,1)
            pl.BlockSpec(memory_space=pltpu.MemorySpace.VMEM),   # W_ih row
            pl.BlockSpec(memory_space=pltpu.MemorySpace.VMEM),   # fused bias
            pl.BlockSpec(memory_space=pltpu.MemorySpace.VMEM),   # W_hh bf16
        ],
        out_specs=pl.BlockSpec(memory_space=pltpu.MemorySpace.VMEM),
    )(x_tb1, wih_p, bias_p, whh_p)

    # Final Linear (O=1): plain JAX on the sliced hidden state rather than an
    # N=1 MXU matmul with a masked 1-lane store inside the kernel.
    h_last = h_last_p[:B, :H]
    return h_last @ params["wlin_t"] + params["b_lin"]


def init_params(key, input_size=1, hidden_size=64, output_size=1):
    """Deterministic init mirroring PyTorch default shapes (transposed)."""
    k = 1.0 / jnp.sqrt(jnp.float32(hidden_size))
    keys = jax.random.split(key, 6)
    u = lambda kk, shape, bound: jax.random.uniform(
        kk, shape, jnp.float32, -bound, bound)
    return {
        "wih_t": u(keys[0], (input_size, 4 * hidden_size), k),    # W_ih^T
        "whh_t": u(keys[1], (hidden_size, 4 * hidden_size), k),   # W_hh^T
        "b_ih": u(keys[2], (4 * hidden_size,), k),
        "b_hh": u(keys[3], (4 * hidden_size,), k),
        "wlin_t": u(keys[4], (hidden_size, output_size), k),      # W_lin^T
        "b_lin": u(keys[5], (output_size,), k),
    }


def lstm_model_reference(x, params):
    """Pure-JAX f32 reference (no padding, scan) for correctness checking."""
    B, T, I = x.shape
    H = params["whh_t"].shape[0]
    h = jnp.zeros((B, H), jnp.float32)
    c = jnp.zeros((B, H), jnp.float32)

    def step(carry, x_t):
        h, c = carry
        gates = (x_t @ params["wih_t"] + h @ params["whh_t"]
                 + params["b_ih"] + params["b_hh"])
        i_g = jax.nn.sigmoid(gates[:, 0 * H:1 * H])
        f_g = jax.nn.sigmoid(gates[:, 1 * H:2 * H])
        g_g = jnp.tanh(gates[:, 2 * H:3 * H])
        o_g = jax.nn.sigmoid(gates[:, 3 * H:4 * H])
        c = f_g * c + i_g * g_g
        h = o_g * jnp.tanh(c)
        return (h, c), None

    (h, _), _ = jax.lax.scan(step, (h, c), jnp.transpose(x, (1, 0, 2)))
    return h @ params["wlin_t"] + params["b_lin"]


if __name__ == "__main__":
    B, T, I, H, O = 2, 8, 1, 64, 1
    key = jax.random.PRNGKey(0)
    kx, kp = jax.random.split(key)
    x = jax.random.normal(kx, (B, T, I), jnp.float32)
    params = init_params(kp, input_size=I, hidden_size=H, output_size=O)

    out = lstm_model_forward(x, params)
    out = jax.block_until_ready(out)

    ref = lstm_model_reference(x, params)
    assert out.shape == (B, O)
    # Tolerance loosened for the bf16 recurrent-weight matmul (f32 accumulate);
    # any structural bug (gate order / slicing) would blow far past this.
    assert jnp.allclose(out, ref, atol=2e-2, rtol=2e-2), (out, ref)
    print("KERNEL_OK")
</pallas_src>

<mosaic_0001>
module attributes {stable_mosaic.version = 11 : i64} {
  func.func @_lstm_fused_kernel(%arg0: memref<8x8x1xf32, #tpu.memory_space<vmem>>, %arg1: memref<1x512xf32, #tpu.memory_space<vmem>>, %arg2: memref<1x512xf32, #tpu.memory_space<vmem>>, %arg3: memref<128x512xbf16, #tpu.memory_space<vmem>>, %arg4: memref<8x128xf32, #tpu.memory_space<vmem>>) attributes {dimension_semantics = [], scalar_prefetch = 0 : i64, scratch_operands = 0 : i64, tpu.core_type = #tpu.core_type<tc>} {
    %cst = arith.constant 0.000000e+00 : f32
    %0 = vector.broadcast %cst : f32 to vector<8x128xf32>
    %cst_0 = arith.constant 0.000000e+00 : f32
    %1 = vector.broadcast %cst_0 : f32 to vector<8x128xf32>
    %c0_i32 = arith.constant 0 : i32
    %2 = arith.index_cast %c0_i32 : i32 to index
    %c0 = arith.constant 0 : index
    %c0_1 = arith.constant 0 : index
    %3 = vector.load %arg0[%2, %c0, %c0_1] : memref<8x8x1xf32, #tpu.memory_space<vmem>>, vector<1x8x1xf32>
    %4 = vector.shape_cast %3 : vector<1x8x1xf32> to vector<8x1xf32>
    %c0_2 = arith.constant 0 : index
    %c0_3 = arith.constant 0 : index
    %5 = vector.load %arg1[%c0_2, %c0_3] : memref<1x512xf32, #tpu.memory_space<vmem>>, vector<1x512xf32>
    %6 = vector.broadcast %4 : vector<8x1xf32> to vector<8x512xf32>
    %7 = vector.broadcast %5 : vector<1x512xf32> to vector<8x512xf32>
    %8 = arith.mulf %6, %7 : vector<8x512xf32>
    %c0_4 = arith.constant 0 : index
    %c0_5 = arith.constant 0 : index
    %9 = vector.load %arg2[%c0_4, %c0_5] : memref<1x512xf32, #tpu.memory_space<vmem>>, vector<1x512xf32>
    %10 = vector.broadcast %9 : vector<1x512xf32> to vector<8x512xf32>
    %11 = arith.addf %8, %10 : vector<8x512xf32>
    %12 = arith.truncf %0 : vector<8x128xf32> to vector<8x128xbf16>
    %c0_6 = arith.constant 0 : index
    %c0_7 = arith.constant 0 : index
    %13 = vector.load %arg3[%c0_6, %c0_7] : memref<128x512xbf16, #tpu.memory_space<vmem>>, vector<128x512xbf16>
    %cst_8 = arith.constant dense<0.000000e+00> : vector<8x512xf32>
    %14 = tpu.matmul %12, %13, %cst_8 {dimension_numbers = #tpu.dot_dimension_numbers<[1], [0], [0], [1], [0, 0, 1, 1], [], []>} : vector<8x128xbf16>, vector<128x512xbf16>, vector<8x512xf32> -> vector<8x512xf32>
    %15 = arith.addf %11, %14 : vector<8x512xf32>
    %16 = vector.extract_strided_slice %15 {offsets = [0, 0], sizes = [8, 128], strides = [1, 1]} : vector<8x512xf32> to vector<8x128xf32>
    %cst_9 = arith.constant 5.000000e-01 : f32
    %17 = vector.broadcast %cst_9 : f32 to vector<8x128xf32>
    %18 = arith.mulf %17, %16 : vector<8x128xf32>
    %19 = math.tanh %18 : vector<8x128xf32>
    %cst_10 = arith.constant 5.000000e-01 : f32
    %20 = vector.broadcast %cst_10 : f32 to vector<8x128xf32>
    %21 = arith.mulf %20, %19 : vector<8x128xf32>
    %cst_11 = arith.constant 5.000000e-01 : f32
    %22 = vector.broadcast %cst_11 : f32 to vector<8x128xf32>
    %23 = arith.addf %21, %22 : vector<8x128xf32>
    %24 = vector.extract_strided_slice %15 {offsets = [0, 128], sizes = [8, 128], strides = [1, 1]} : vector<8x512xf32> to vector<8x128xf32>
    %cst_12 = arith.constant 5.000000e-01 : f32
    %25 = vector.broadcast %cst_12 : f32 to vector<8x128xf32>
    %26 = arith.mulf %25, %24 : vector<8x128xf32>
    %27 = math.tanh %26 : vector<8x128xf32>
    %cst_13 = arith.constant 5.000000e-01 : f32
    %28 = vector.broadcast %cst_13 : f32 to vector<8x128xf32>
    %29 = arith.mulf %28, %27 : vector<8x128xf32>
    %cst_14 = arith.constant 5.000000e-01 : f32
    %30 = vector.broadcast %cst_14 : f32 to vector<8x128xf32>
    %31 = arith.addf %29, %30 : vector<8x128xf32>
    %32 = vector.extract_strided_slice %15 {offsets = [0, 256], sizes = [8, 128], strides = [1, 1]} : vector<8x512xf32> to vector<8x128xf32>
    %33 = math.tanh %32 : vector<8x128xf32>
    %34 = vector.extract_strided_slice %15 {offsets = [0, 384], sizes = [8, 128], strides = [1, 1]} : vector<8x512xf32> to vector<8x128xf32>
    %cst_15 = arith.constant 5.000000e-01 : f32
    %35 = vector.broadcast %cst_15 : f32 to vector<8x128xf32>
    %36 = arith.mulf %35, %34 : vector<8x128xf32>
    %37 = math.tanh %36 : vector<8x128xf32>
    %cst_16 = arith.constant 5.000000e-01 : f32
    %38 = vector.broadcast %cst_16 : f32 to vector<8x128xf32>
    %39 = arith.mulf %38, %37 : vector<8x128xf32>
    %cst_17 = arith.constant 5.000000e-01 : f32
    %40 = vector.broadcast %cst_17 : f32 to vector<8x128xf32>
    %41 = arith.addf %39, %40 : vector<8x128xf32>
    %42 = arith.mulf %31, %1 : vector<8x128xf32>
    %43 = arith.mulf %23, %33 : vector<8x128xf32>
    %44 = arith.addf %42, %43 : vector<8x128xf32>
    %45 = math.tanh %44 : vector<8x128xf32>
    %46 = arith.mulf %41, %45 : vector<8x128xf32>
    %c1_i32 = arith.constant 1 : i32
    %47 = arith.index_cast %c1_i32 : i32 to index
    %c0_18 = arith.constant 0 : index
    %c0_19 = arith.constant 0 : index
    %48 = vector.load %arg0[%47, %c0_18, %c0_19] : memref<8x8x1xf32, #tpu.memory_space<vmem>>, vector<1x8x1xf32>
    %49 = vector.shape_cast %48 : vector<1x8x1xf32> to vector<8x1xf32>
    %c0_20 = arith.constant 0 : index
    %c0_21 = arith.constant 0 : index
    %50 = vector.load %arg1[%c0_20, %c0_21] : memref<1x512xf32, #tpu.memory_space<vmem>>, vector<1x512xf32>
    %51 = vector.broadcast %49 : vector<8x1xf32> to vector<8x512xf32>
    %52 = vector.broadcast %50 : vector<1x512xf32> to vector<8x512xf32>
    %53 = arith.mulf %51, %52 : vector<8x512xf32>
    %c0_22 = arith.constant 0 : index
    %c0_23 = arith.constant 0 : index
    %54 = vector.load %arg2[%c0_22, %c0_23] : memref<1x512xf32, #tpu.memory_space<vmem>>, vector<1x512xf32>
    %55 = vector.broadcast %54 : vector<1x512xf32> to vector<8x512xf32>
    %56 = arith.addf %53, %55 : vector<8x512xf32>
    %57 = arith.truncf %46 : vector<8x128xf32> to vector<8x128xbf16>
    %c0_24 = arith.constant 0 : index
    %c0_25 = arith.constant 0 : index
    %58 = vector.load %arg3[%c0_24, %c0_25] : memref<128x512xbf16, #tpu.memory_space<vmem>>, vector<128x512xbf16>
    %cst_26 = arith.constant dense<0.000000e+00> : vector<8x512xf32>
    %59 = tpu.matmul %57, %58, %cst_26 {dimension_numbers = #tpu.dot_dimension_numbers<[1], [0], [0], [1], [0, 0, 1, 1], [], []>} : vector<8x128xbf16>, vector<128x512xbf16>, vector<8x512xf32> -> vector<8x512xf32>
    %60 = arith.addf %56, %59 : vector<8x512xf32>
    %61 = vector.extract_strided_slice %60 {offsets = [0, 0], sizes = [8, 128], strides = [1, 1]} : vector<8x512xf32> to vector<8x128xf32>
    %cst_27 = arith.constant 5.000000e-01 : f32
    %62 = vector.broadcast %cst_27 : f32 to vector<8x128xf32>
    %63 = arith.mulf %62, %61 : vector<8x128xf32>
    %64 = math.tanh %63 : vector<8x128xf32>
    %cst_28 = arith.constant 5.000000e-01 : f32
    %65 = vector.broadcast %cst_28 : f32 to vector<8x128xf32>
    %66 = arith.mulf %65, %64 : vector<8x128xf32>
    %cst_29 = arith.constant 5.000000e-01 : f32
    %67 = vector.broadcast %cst_29 : f32 to vector<8x128xf32>
    %68 = arith.addf %66, %67 : vector<8x128xf32>
    %69 = vector.extract_strided_slice %60 {offsets = [0, 128], sizes = [8, 128], strides = [1, 1]} : vector<8x512xf32> to vector<8x128xf32>
    %cst_30 = arith.constant 5.000000e-01 : f32
    %70 = vector.broadcast %cst_30 : f32 to vector<8x128xf32>
    %71 = arith.mulf %70, %69 : vector<8x128xf32>
    %72 = math.tanh %71 : vector<8x128xf32>
    %cst_31 = arith.constant 5.000000e-01 : f32
    %73 = vector.broadcast %cst_31 : f32 to vector<8x128xf32>
    %74 = arith.mulf %73, %72 : vector<8x128xf32>
    %cst_32 = arith.constant 5.000000e-01 : f32
    %75 = vector.broadcast %cst_32 : f32 to vector<8x128xf32>
    %76 = arith.addf %74, %75 : vector<8x128xf32>
    %77 = vector.extract_strided_slice %60 {offsets = [0, 256], sizes = [8, 128], strides = [1, 1]} : vector<8x512xf32> to vector<8x128xf32>
    %78 = math.tanh %77 : vector<8x128xf32>
    %79 = vector.extract_strided_slice %60 {offsets = [0, 384], sizes = [8, 128], strides = [1, 1]} : vector<8x512xf32> to vector<8x128xf32>
    %cst_33 = arith.constant 5.000000e-01 : f32
    %80 = vector.broadcast %cst_33 : f32 to vector<8x128xf32>
    %81 = arith.mulf %80, %79 : vector<8x128xf32>
    %82 = math.tanh %81 : vector<8x128xf32>
    %cst_34 = arith.constant 5.000000e-01 : f32
    %83 = vector.broadcast %cst_34 : f32 to vector<8x128xf32>
    %84 = arith.mulf %83, %82 : vector<8x128xf32>
    %cst_35 = arith.constant 5.000000e-01 : f32
    %85 = vector.broadcast %cst_35 : f32 to vector<8x128xf32>
    %86 = arith.addf %84, %85 : vector<8x128xf32>
    %87 = arith.mulf %76, %44 : vector<8x128xf32>
    %88 = arith.mulf %68, %78 : vector<8x128xf32>
    %89 = arith.addf %87, %88 : vector<8x128xf32>
    %90 = math.tanh %89 : vector<8x128xf32>
    %91 = arith.mulf %86, %90 : vector<8x128xf32>
    %c2_i32 = arith.constant 2 : i32
    %92 = arith.index_cast %c2_i32 : i32 to index
    %c0_36 = arith.constant 0 : index
    %c0_37 = arith.constant 0 : index
    %93 = vector.load %arg0[%92, %c0_36, %c0_37] : memref<8x8x1xf32, #tpu.memory_space<vmem>>, vector<1x8x1xf32>
    %94 = vector.shape_cast %93 : vector<1x8x1xf32> to vector<8x1xf32>
    %c0_38 = arith.constant 0 : index
    %c0_39 = arith.constant 0 : index
    %95 = vector.load %arg1[%c0_38, %c0_39] : memref<1x512xf32, #tpu.memory_space<vmem>>, vector<1x512xf32>
    %96 = vector.broadcast %94 : vector<8x1xf32> to vector<8x512xf32>
    %97 = vector.broadcast %95 : vector<1x512xf32> to vector<8x512xf32>
    %98 = arith.mulf %96, %97 : vector<8x512xf32>
    %c0_40 = arith.constant 0 : index
    %c0_41 = arith.constant 0 : index
    %99 = vector.load %arg2[%c0_40, %c0_41] : memref<1x512xf32, #tpu.memory_space<vmem>>, vector<1x512xf32>
    %100 = vector.broadcast %99 : vector<1x512xf32> to vector<8x512xf32>
    %101 = arith.addf %98, %100 : vector<8x512xf32>
    %102 = arith.truncf %91 : vector<8x128xf32> to vector<8x128xbf16>
    %c0_42 = arith.constant 0 : index
    %c0_43 = arith.constant 0 : index
    %103 = vector.load %arg3[%c0_42, %c0_43] : memref<128x512xbf16, #tpu.memory_space<vmem>>, vector<128x512xbf16>
    %cst_44 = arith.constant dense<0.000000e+00> : vector<8x512xf32>
    %104 = tpu.matmul %102, %103, %cst_44 {dimension_numbers = #tpu.dot_dimension_numbers<[1], [0], [0], [1], [0, 0, 1, 1], [], []>} : vector<8x128xbf16>, vector<128x512xbf16>, vector<8x512xf32> -> vector<8x512xf32>
    %105 = arith.addf %101, %104 : vector<8x512xf32>
    %106 = vector.extract_strided_slice %105 {offsets = [0, 0], sizes = [8, 128], strides = [1, 1]} : vector<8x512xf32> to vector<8x128xf32>
    %cst_45 = arith.constant 5.000000e-01 : f32
    %107 = vector.broadcast %cst_45 : f32 to vector<8x128xf32>
    %108 = arith.mulf %107, %106 : vector<8x128xf32>
    %109 = math.tanh %108 : vector<8x128xf32>
    %cst_46 = arith.constant 5.000000e-01 : f32
    %110 = vector.broadcast %cst_46 : f32 to vector<8x128xf32>
    %111 = arith.mulf %110, %109 : vector<8x128xf32>
    %cst_47 = arith.constant 5.000000e-01 : f32
    %112 = vector.broadcast %cst_47 : f32 to vector<8x128xf32>
    %113 = arith.addf %111, %112 : vector<8x128xf32>
    %114 = vector.extract_strided_slice %105 {offsets = [0, 128], sizes = [8, 128], strides = [1, 1]} : vector<8x512xf32> to vector<8x128xf32>
    %cst_48 = arith.constant 5.000000e-01 : f32
    %115 = vector.broadcast %cst_48 : f32 to vector<8x128xf32>
    %116 = arith.mulf %115, %114 : vector<8x128xf32>
    %117 = math.tanh %116 : vector<8x128xf32>
    %cst_49 = arith.constant 5.000000e-01 : f32
    %118 = vector.broadcast %cst_49 : f32 to vector<8x128xf32>
    %119 = arith.mulf %118, %117 : vector<8x128xf32>
    %cst_50 = arith.constant 5.000000e-01 : f32
    %120 = vector.broadcast %cst_50 : f32 to vector<8x128xf32>
    %121 = arith.addf %119, %120 : vector<8x128xf32>
    %122 = vector.extract_strided_slice %105 {offsets = [0, 256], sizes = [8, 128], strides = [1, 1]} : vector<8x512xf32> to vector<8x128xf32>
    %123 = math.tanh %122 : vector<8x128xf32>
    %124 = vector.extract_strided_slice %105 {offsets = [0, 384], sizes = [8, 128], strides = [1, 1]} : vector<8x512xf32> to vector<8x128xf32>
    %cst_51 = arith.constant 5.000000e-01 : f32
    %125 = vector.broadcast %cst_51 : f32 to vector<8x128xf32>
    %126 = arith.mulf %125, %124 : vector<8x128xf32>
    %127 = math.tanh %126 : vector<8x128xf32>
    %cst_52 = arith.constant 5.000000e-01 : f32
    %128 = vector.broadcast %cst_52 : f32 to vector<8x128xf32>
    %129 = arith.mulf %128, %127 : vector<8x128xf32>
    %cst_53 = arith.constant 5.000000e-01 : f32
    %130 = vector.broadcast %cst_53 : f32 to vector<8x128xf32>
    %131 = arith.addf %129, %130 : vector<8x128xf32>
    %132 = arith.mulf %121, %89 : vector<8x128xf32>
    %133 = arith.mulf %113, %123 : vector<8x128xf32>
    %134 = arith.addf %132, %133 : vector<8x128xf32>
    %135 = math.tanh %134 : vector<8x128xf32>
    %136 = arith.mulf %131, %135 : vector<8x128xf32>
    %c3_i32 = arith.constant 3 : i32
    %137 = arith.index_cast %c3_i32 : i32 to index
    %c0_54 = arith.constant 0 : index
    %c0_55 = arith.constant 0 : index
    %138 = vector.load %arg0[%137, %c0_54, %c0_55] : memref<8x8x1xf32, #tpu.memory_space<vmem>>, vector<1x8x1xf32>
    %139 = vector.shape_cast %138 : vector<1x8x1xf32> to vector<8x1xf32>
    %c0_56 = arith.constant 0 : index
    %c0_57 = arith.constant 0 : index
    %140 = vector.load %arg1[%c0_56, %c0_57] : memref<1x512xf32, #tpu.memory_space<vmem>>, vector<1x512xf32>
    %141 = vector.broadcast %139 : vector<8x1xf32> to vector<8x512xf32>
    %142 = vector.broadcast %140 : vector<1x512xf32> to vector<8x512xf32>
    %143 = arith.mulf %141, %142 : vector<8x512xf32>
    %c0_58 = arith.constant 0 : index
    %c0_59 = arith.constant 0 : index
    %144 = vector.load %arg2[%c0_58, %c0_59] : memref<1x512xf32, #tpu.memory_space<vmem>>, vector<1x512xf32>
    %145 = vector.broadcast %144 : vector<1x512xf32> to vector<8x512xf32>
    %146 = arith.addf %143, %145 : vector<8x512xf32>
    %147 = arith.truncf %136 : vector<8x128xf32> to vector<8x128xbf16>
    %c0_60 = arith.constant 0 : index
    %c0_61 = arith.constant 0 : index
    %148 = vector.load %arg3[%c0_60, %c0_61] : memref<128x512xbf16, #tpu.memory_space<vmem>>, vector<128x512xbf16>
    %cst_62 = arith.constant dense<0.000000e+00> : vector<8x512xf32>
    %149 = tpu.matmul %147, %148, %cst_62 {dimension_numbers = #tpu.dot_dimension_numbers<[1], [0], [0], [1], [0, 0, 1, 1], [], []>} : vector<8x128xbf16>, vector<128x512xbf16>, vector<8x512xf32> -> vector<8x512xf32>
    %150 = arith.addf %146, %149 : vector<8x512xf32>
    %151 = vector.extract_strided_slice %150 {offsets = [0, 0], sizes = [8, 128], strides = [1, 1]} : vector<8x512xf32> to vector<8x128xf32>
    %cst_63 = arith.constant 5.000000e-01 : f32
    %152 = vector.broadcast %cst_63 : f32 to vector<8x128xf32>
    %153 = arith.mulf %152, %151 : vector<8x128xf32>
    %154 = math.tanh %153 : vector<8x128xf32>
    %cst_64 = arith.constant 5.000000e-01 : f32
    %155 = vector.broadcast %cst_64 : f32 to vector<8x128xf32>
    %156 = arith.mulf %155, %154 : vector<8x128xf32>
    %cst_65 = arith.constant 5.000000e-01 : f32
    %157 = vector.broadcast %cst_65 : f32 to vector<8x128xf32>
    %158 = arith.addf %156, %157 : vector<8x128xf32>
    %159 = vector.extract_strided_slice %150 {offsets = [0, 128], sizes = [8, 128], strides = [1, 1]} : vector<8x512xf32> to vector<8x128xf32>
    %cst_66 = arith.constant 5.000000e-01 : f32
    %160 = vector.broadcast %cst_66 : f32 to vector<8x128xf32>
    %161 = arith.mulf %160, %159 : vector<8x128xf32>
    %162 = math.tanh %161 : vector<8x128xf32>
    %cst_67 = arith.constant 5.000000e-01 : f32
    %163 = vector.broadcast %cst_67 : f32 to vector<8x128xf32>
    %164 = arith.mulf %163, %162 : vector<8x128xf32>
    %cst_68 = arith.constant 5.000000e-01 : f32
    %165 = vector.broadcast %cst_68 : f32 to vector<8x128xf32>
    %166 = arith.addf %164, %165 : vector<8x128xf32>
    %167 = vector.extract_strided_slice %150 {offsets = [0, 256], sizes = [8, 128], strides = [1, 1]} : vector<8x512xf32> to vector<8x128xf32>
    %168 = math.tanh %167 : vector<8x128xf32>
    %169 = vector.extract_strided_slice %150 {offsets = [0, 384], sizes = [8, 128], strides = [1, 1]} : vector<8x512xf32> to vector<8x128xf32>
    %cst_69 = arith.constant 5.000000e-01 : f32
    %170 = vector.broadcast %cst_69 : f32 to vector<8x128xf32>
    %171 = arith.mulf %170, %169 : vector<8x128xf32>
    %172 = math.tanh %171 : vector<8x128xf32>
    %cst_70 = arith.constant 5.000000e-01 : f32
    %173 = vector.broadcast %cst_70 : f32 to vector<8x128xf32>
    %174 = arith.mulf %173, %172 : vector<8x128xf32>
    %cst_71 = arith.constant 5.000000e-01 : f32
    %175 = vector.broadcast %cst_71 : f32 to vector<8x128xf32>
    %176 = arith.addf %174, %175 : vector<8x128xf32>
    %177 = arith.mulf %166, %134 : vector<8x128xf32>
    %178 = arith.mulf %158, %168 : vector<8x128xf32>
    %179 = arith.addf %177, %178 : vector<8x128xf32>
    %180 = math.tanh %179 : vector<8x128xf32>
    %181 = arith.mulf %176, %180 : vector<8x128xf32>
    %c4_i32 = arith.constant 4 : i32
    %182 = arith.index_cast %c4_i32 : i32 to index
    %c0_72 = arith.constant 0 : index
    %c0_73 = arith.constant 0 : index
    %183 = vector.load %arg0[%182, %c0_72, %c0_73] : memref<8x8x1xf32, #tpu.memory_space<vmem>>, vector<1x8x1xf32>
    %184 = vector.shape_cast %183 : vector<1x8x1xf32> to vector<8x1xf32>
    %c0_74 = arith.constant 0 : index
    %c0_75 = arith.constant 0 : index
    %185 = vector.load %arg1[%c0_74, %c0_75] : memref<1x512xf32, #tpu.memory_space<vmem>>, vector<1x512xf32>
    %186 = vector.broadcast %184 : vector<8x1xf32> to vector<8x512xf32>
    %187 = vector.broadcast %185 : vector<1x512xf32> to vector<8x512xf32>
    %188 = arith.mulf %186, %187 : vector<8x512xf32>
    %c0_76 = arith.constant 0 : index
    %c0_77 = arith.constant 0 : index
    %189 = vector.load %arg2[%c0_76, %c0_77] : memref<1x512xf32, #tpu.memory_space<vmem>>, vector<1x512xf32>
    %190 = vector.broadcast %189 : vector<1x512xf32> to vector<8x512xf32>
    %191 = arith.addf %188, %190 : vector<8x512xf32>
    %192 = arith.truncf %181 : vector<8x128xf32> to vector<8x128xbf16>
    %c0_78 = arith.constant 0 : index
    %c0_79 = arith.constant 0 : index
    %193 = vector.load %arg3[%c0_78, %c0_79] : memref<128x512xbf16, #tpu.memory_space<vmem>>, vector<128x512xbf16>
    %cst_80 = arith.constant dense<0.000000e+00> : vector<8x512xf32>
    %194 = tpu.matmul %192, %193, %cst_80 {dimension_numbers = #tpu.dot_dimension_numbers<[1], [0], [0], [1], [0, 0, 1, 1], [], []>} : vector<8x128xbf16>, vector<128x512xbf16>, vector<8x512xf32> -> vector<8x512xf32>
    %195 = arith.addf %191, %194 : vector<8x512xf32>
    %196 = vector.extract_strided_slice %195 {offsets = [0, 0], sizes = [8, 128], strides = [1, 1]} : vector<8x512xf32> to vector<8x128xf32>
    %cst_81 = arith.constant 5.000000e-01 : f32
    %197 = vector.broadcast %cst_81 : f32 to vector<8x128xf32>
    %198 = arith.mulf %197, %196 : vector<8x128xf32>
    %199 = math.tanh %198 : vector<8x128xf32>
    %cst_82 = arith.constant 5.000000e-01 : f32
    %200 = vector.broadcast %cst_82 : f32 to vector<8x128xf32>
    %201 = arith.mulf %200, %199 : vector<8x128xf32>
    %cst_83 = arith.constant 5.000000e-01 : f32
    %202 = vector.broadcast %cst_83 : f32 to vector<8x128xf32>
    %203 = arith.addf %201, %202 : vector<8x128xf32>
    %204 = vector.extract_strided_slice %195 {offsets = [0, 128], sizes = [8, 128], strides = [1, 1]} : vector<8x512xf32> to vector<8x128xf32>
    %cst_84 = arith.constant 5.000000e-01 : f32
    %205 = vector.broadcast %cst_84 : f32 to vector<8x128xf32>
    %206 = arith.mulf %205, %204 : vector<8x128xf32>
    %207 = math.tanh %206 : vector<8x128xf32>
    %cst_85 = arith.constant 5.000000e-01 : f32
    %208 = vector.broadcast %cst_85 : f32 to vector<8x128xf32>
    %209 = arith.mulf %208, %207 : vector<8x128xf32>
    %cst_86 = arith.constant 5.000000e-01 : f32
    %210 = vector.broadcast %cst_86 : f32 to vector<8x128xf32>
    %211 = arith.addf %209, %210 : vector<8x128xf32>
    %212 = vector.extract_strided_slice %195 {offsets = [0, 256], sizes = [8, 128], strides = [1, 1]} : vector<8x512xf32> to vector<8x128xf32>
    %213 = math.tanh %212 : vector<8x128xf32>
    %214 = vector.extract_strided_slice %195 {offsets = [0, 384], sizes = [8, 128], strides = [1, 1]} : vector<8x512xf32> to vector<8x128xf32>
    %cst_87 = arith.constant 5.000000e-01 : f32
    %215 = vector.broadcast %cst_87 : f32 to vector<8x128xf32>
    %216 = arith.mulf %215, %214 : vector<8x128xf32>
    %217 = math.tanh %216 : vector<8x128xf32>
    %cst_88 = arith.constant 5.000000e-01 : f32
    %218 = vector.broadcast %cst_88 : f32 to vector<8x128xf32>
    %219 = arith.mulf %218, %217 : vector<8x128xf32>
    %cst_89 = arith.constant 5.000000e-01 : f32
    %220 = vector.broadcast %cst_89 : f32 to vector<8x128xf32>
    %221 = arith.addf %219, %220 : vector<8x128xf32>
    %222 = arith.mulf %211, %179 : vector<8x128xf32>
    %223 = arith.mulf %203, %213 : vector<8x128xf32>
    %224 = arith.addf %222, %223 : vector<8x128xf32>
    %225 = math.tanh %224 : vector<8x128xf32>
    %226 = arith.mulf %221, %225 : vector<8x128xf32>
    %c5_i32 = arith.constant 5 : i32
    %227 = arith.index_cast %c5_i32 : i32 to index
    %c0_90 = arith.constant 0 : index
    %c0_91 = arith.constant 0 : index
    %228 = vector.load %arg0[%227, %c0_90, %c0_91] : memref<8x8x1xf32, #tpu.memory_space<vmem>>, vector<1x8x1xf32>
    %229 = vector.shape_cast %228 : vector<1x8x1xf32> to vector<8x1xf32>
    %c0_92 = arith.constant 0 : index
    %c0_93 = arith.constant 0 : index
    %230 = vector.load %arg1[%c0_92, %c0_93] : memref<1x512xf32, #tpu.memory_space<vmem>>, vector<1x512xf32>
    %231 = vector.broadcast %229 : vector<8x1xf32> to vector<8x512xf32>
    %232 = vector.broadcast %230 : vector<1x512xf32> to vector<8x512xf32>
    %233 = arith.mulf %231, %232 : vector<8x512xf32>
    %c0_94 = arith.constant 0 : index
    %c0_95 = arith.constant 0 : index
    %234 = vector.load %arg2[%c0_94, %c0_95] : memref<1x512xf32, #tpu.memory_space<vmem>>, vector<1x512xf32>
    %235 = vector.broadcast %234 : vector<1x512xf32> to vector<8x512xf32>
    %236 = arith.addf %233, %235 : vector<8x512xf32>
    %237 = arith.truncf %226 : vector<8x128xf32> to vector<8x128xbf16>
    %c0_96 = arith.constant 0 : index
    %c0_97 = arith.constant 0 : index
    %238 = vector.load %arg3[%c0_96, %c0_97] : memref<128x512xbf16, #tpu.memory_space<vmem>>, vector<128x512xbf16>
    %cst_98 = arith.constant dense<0.000000e+00> : vector<8x512xf32>
    %239 = tpu.matmul %237, %238, %cst_98 {dimension_numbers = #tpu.dot_dimension_numbers<[1], [0], [0], [1], [0, 0, 1, 1], [], []>} : vector<8x128xbf16>, vector<128x512xbf16>, vector<8x512xf32> -> vector<8x512xf32>
    %240 = arith.addf %236, %239 : vector<8x512xf32>
    %241 = vector.extract_strided_slice %240 {offsets = [0, 0], sizes = [8, 128], strides = [1, 1]} : vector<8x512xf32> to vector<8x128xf32>
    %cst_99 = arith.constant 5.000000e-01 : f32
    %242 = vector.broadcast %cst_99 : f32 to vector<8x128xf32>
    %243 = arith.mulf %242, %241 : vector<8x128xf32>
    %244 = math.tanh %243 : vector<8x128xf32>
    %cst_100 = arith.constant 5.000000e-01 : f32
    %245 = vector.broadcast %cst_100 : f32 to vector<8x128xf32>
    %246 = arith.mulf %245, %244 : vector<8x128xf32>
    %cst_101 = arith.constant 5.000000e-01 : f32
    %247 = vector.broadcast %cst_101 : f32 to vector<8x128xf32>
    %248 = arith.addf %246, %247 : vector<8x128xf32>
    %249 = vector.extract_strided_slice %240 {offsets = [0, 128], sizes = [8, 128], strides = [1, 1]} : vector<8x512xf32> to vector<8x128xf32>
    %cst_102 = arith.constant 5.000000e-01 : f32
    %250 = vector.broadcast %cst_102 : f32 to vector<8x128xf32>
    %251 = arith.mulf %250, %249 : vector<8x128xf32>
    %252 = math.tanh %251 : vector<8x128xf32>
    %cst_103 = arith.constant 5.000000e-01 : f32
    %253 = vector.broadcast %cst_103 : f32 to vector<8x128xf32>
    %254 = arith.mulf %253, %252 : vector<8x128xf32>
    %cst_104 = arith.constant 5.000000e-01 : f32
    %255 = vector.broadcast %cst_104 : f32 to vector<8x128xf32>
    %256 = arith.addf %254, %255 : vector<8x128xf32>
    %257 = vector.extract_strided_slice %240 {offsets = [0, 256], sizes = [8, 128], strides = [1, 1]} : vector<8x512xf32> to vector<8x128xf32>
    %258 = math.tanh %257 : vector<8x128xf32>
    %259 = vector.extract_strided_slice %240 {offsets = [0, 384], sizes = [8, 128], strides = [1, 1]} : vector<8x512xf32> to vector<8x128xf32>
    %cst_105 = arith.constant 5.000000e-01 : f32
    %260 = vector.broadcast %cst_105 : f32 to vector<8x128xf32>
    %261 = arith.mulf %260, %259 : vector<8x128xf32>
    %262 = math.tanh %261 : vector<8x128xf32>
    %cst_106 = arith.constant 5.000000e-01 : f32
    %263 = vector.broadcast %cst_106 : f32 to vector<8x128xf32>
    %264 = arith.mulf %263, %262 : vector<8x128xf32>
    %cst_107 = arith.constant 5.000000e-01 : f32
    %265 = vector.broadcast %cst_107 : f32 to vector<8x128xf32>
    %266 = arith.addf %264, %265 : vector<8x128xf32>
    %267 = arith.mulf %256, %224 : vector<8x128xf32>
    %268 = arith.mulf %248, %258 : vector<8x128xf32>
    %269 = arith.addf %267, %268 : vector<8x128xf32>
    %270 = math.tanh %269 : vector<8x128xf32>
    %271 = arith.mulf %266, %270 : vector<8x128xf32>
    %c6_i32 = arith.constant 6 : i32
    %272 = arith.index_cast %c6_i32 : i32 to index
    %c0_108 = arith.constant 0 : index
    %c0_109 = arith.constant 0 : index
    %273 = vector.load %arg0[%272, %c0_108, %c0_109] : memref<8x8x1xf32, #tpu.memory_space<vmem>>, vector<1x8x1xf32>
    %274 = vector.shape_cast %273 : vector<1x8x1xf32> to vector<8x1xf32>
    %c0_110 = arith.constant 0 : index
    %c0_111 = arith.constant 0 : index
    %275 = vector.load %arg1[%c0_110, %c0_111] : memref<1x512xf32, #tpu.memory_space<vmem>>, vector<1x512xf32>
    %276 = vector.broadcast %274 : vector<8x1xf32> to vector<8x512xf32>
    %277 = vector.broadcast %275 : vector<1x512xf32> to vector<8x512xf32>
    %278 = arith.mulf %276, %277 : vector<8x512xf32>
    %c0_112 = arith.constant 0 : index
    %c0_113 = arith.constant 0 : index
    %279 = vector.load %arg2[%c0_112, %c0_113] : memref<1x512xf32, #tpu.memory_space<vmem>>, vector<1x512xf32>
    %280 = vector.broadcast %279 : vector<1x512xf32> to vector<8x512xf32>
    %281 = arith.addf %278, %280 : vector<8x512xf32>
    %282 = arith.truncf %271 : vector<8x128xf32> to vector<8x128xbf16>
    %c0_114 = arith.constant 0 : index
    %c0_115 = arith.constant 0 : index
    %283 = vector.load %arg3[%c0_114, %c0_115] : memref<128x512xbf16, #tpu.memory_space<vmem>>, vector<128x512xbf16>
    %cst_116 = arith.constant dense<0.000000e+00> : vector<8x512xf32>
    %284 = tpu.matmul %282, %283, %cst_116 {dimension_numbers = #tpu.dot_dimension_numbers<[1], [0], [0], [1], [0, 0, 1, 1], [], []>} : vector<8x128xbf16>, vector<128x512xbf16>, vector<8x512xf32> -> vector<8x512xf32>
    %285 = arith.addf %281, %284 : vector<8x512xf32>
    %286 = vector.extract_strided_slice %285 {offsets = [0, 0], sizes = [8, 128], strides = [1, 1]} : vector<8x512xf32> to vector<8x128xf32>
    %cst_117 = arith.constant 5.000000e-01 : f32
    %287 = vector.broadcast %cst_117 : f32 to vector<8x128xf32>
    %288 = arith.mulf %287, %286 : vector<8x128xf32>
    %289 = math.tanh %288 : vector<8x128xf32>
    %cst_118 = arith.constant 5.000000e-01 : f32
    %290 = vector.broadcast %cst_118 : f32 to vector<8x128xf32>
    %291 = arith.mulf %290, %289 : vector<8x128xf32>
    %cst_119 = arith.constant 5.000000e-01 : f32
    %292 = vector.broadcast %cst_119 : f32 to vector<8x128xf32>
    %293 = arith.addf %291, %292 : vector<8x128xf32>
    %294 = vector.extract_strided_slice %285 {offsets = [0, 128], sizes = [8, 128], strides = [1, 1]} : vector<8x512xf32> to vector<8x128xf32>
    %cst_120 = arith.constant 5.000000e-01 : f32
    %295 = vector.broadcast %cst_120 : f32 to vector<8x128xf32>
    %296 = arith.mulf %295, %294 : vector<8x128xf32>
    %297 = math.tanh %296 : vector<8x128xf32>
    %cst_121 = arith.constant 5.000000e-01 : f32
    %298 = vector.broadcast %cst_121 : f32 to vector<8x128xf32>
    %299 = arith.mulf %298, %297 : vector<8x128xf32>
    %cst_122 = arith.constant 5.000000e-01 : f32
    %300 = vector.broadcast %cst_122 : f32 to vector<8x128xf32>
    %301 = arith.addf %299, %300 : vector<8x128xf32>
    %302 = vector.extract_strided_slice %285 {offsets = [0, 256], sizes = [8, 128], strides = [1, 1]} : vector<8x512xf32> to vector<8x128xf32>
    %303 = math.tanh %302 : vector<8x128xf32>
    %304 = vector.extract_strided_slice %285 {offsets = [0, 384], sizes = [8, 128], strides = [1, 1]} : vector<8x512xf32> to vector<8x128xf32>
    %cst_123 = arith.constant 5.000000e-01 : f32
    %305 = vector.broadcast %cst_123 : f32 to vector<8x128xf32>
    %306 = arith.mulf %305, %304 : vector<8x128xf32>
    %307 = math.tanh %306 : vector<8x128xf32>
    %cst_124 = arith.constant 5.000000e-01 : f32
    %308 = vector.broadcast %cst_124 : f32 to vector<8x128xf32>
    %309 = arith.mulf %308, %307 : vector<8x128xf32>
    %cst_125 = arith.constant 5.000000e-01 : f32
    %310 = vector.broadcast %cst_125 : f32 to vector<8x128xf32>
    %311 = arith.addf %309, %310 : vector<8x128xf32>
    %312 = arith.mulf %301, %269 : vector<8x128xf32>
    %313 = arith.mulf %293, %303 : vector<8x128xf32>
    %314 = arith.addf %312, %313 : vector<8x128xf32>
    %315 = math.tanh %314 : vector<8x128xf32>
    %316 = arith.mulf %311, %315 : vector<8x128xf32>
    %c7_i32 = arith.constant 7 : i32
    %317 = arith.index_cast %c7_i32 : i32 to index
    %c0_126 = arith.constant 0 : index
    %c0_127 = arith.constant 0 : index
    %318 = vector.load %arg0[%317, %c0_126, %c0_127] : memref<8x8x1xf32, #tpu.memory_space<vmem>>, vector<1x8x1xf32>
    %319 = vector.shape_cast %318 : vector<1x8x1xf32> to vector<8x1xf32>
    %c0_128 = arith.constant 0 : index
    %c0_129 = arith.constant 0 : index
    %320 = vector.load %arg1[%c0_128, %c0_129] : memref<1x512xf32, #tpu.memory_space<vmem>>, vector<1x512xf32>
    %321 = vector.broadcast %319 : vector<8x1xf32> to vector<8x512xf32>
    %322 = vector.broadcast %320 : vector<1x512xf32> to vector<8x512xf32>
    %323 = arith.mulf %321, %322 : vector<8x512xf32>
    %c0_130 = arith.constant 0 : index
    %c0_131 = arith.constant 0 : index
    %324 = vector.load %arg2[%c0_130, %c0_131] : memref<1x512xf32, #tpu.memory_space<vmem>>, vector<1x512xf32>
    %325 = vector.broadcast %324 : vector<1x512xf32> to vector<8x512xf32>
    %326 = arith.addf %323, %325 : vector<8x512xf32>
    %327 = arith.truncf %316 : vector<8x128xf32> to vector<8x128xbf16>
    %c0_132 = arith.constant 0 : index
    %c0_133 = arith.constant 0 : index
    %328 = vector.load %arg3[%c0_132, %c0_133] : memref<128x512xbf16, #tpu.memory_space<vmem>>, vector<128x512xbf16>
    %cst_134 = arith.constant dense<0.000000e+00> : vector<8x512xf32>
    %329 = tpu.matmul %327, %328, %cst_134 {dimension_numbers = #tpu.dot_dimension_numbers<[1], [0], [0], [1], [0, 0, 1, 1], [], []>} : vector<8x128xbf16>, vector<128x512xbf16>, vector<8x512xf32> -> vector<8x512xf32>
    %330 = arith.addf %326, %329 : vector<8x512xf32>
    %331 = vector.extract_strided_slice %330 {offsets = [0, 0], sizes = [8, 128], strides = [1, 1]} : vector<8x512xf32> to vector<8x128xf32>
    %cst_135 = arith.constant 5.000000e-01 : f32
    %332 = vector.broadcast %cst_135 : f32 to vector<8x128xf32>
    %333 = arith.mulf %332, %331 : vector<8x128xf32>
    %334 = math.tanh %333 : vector<8x128xf32>
    %cst_136 = arith.constant 5.000000e-01 : f32
    %335 = vector.broadcast %cst_136 : f32 to vector<8x128xf32>
    %336 = arith.mulf %335, %334 : vector<8x128xf32>
    %cst_137 = arith.constant 5.000000e-01 : f32
    %337 = vector.broadcast %cst_137 : f32 to vector<8x128xf32>
    %338 = arith.addf %336, %337 : vector<8x128xf32>
    %339 = vector.extract_strided_slice %330 {offsets = [0, 128], sizes = [8, 128], strides = [1, 1]} : vector<8x512xf32> to vector<8x128xf32>
    %cst_138 = arith.constant 5.000000e-01 : f32
    %340 = vector.broadcast %cst_138 : f32 to vector<8x128xf32>
    %341 = arith.mulf %340, %339 : vector<8x128xf32>
    %342 = math.tanh %341 : vector<8x128xf32>
    %cst_139 = arith.constant 5.000000e-01 : f32
    %343 = vector.broadcast %cst_139 : f32 to vector<8x128xf32>
    %344 = arith.mulf %343, %342 : vector<8x128xf32>
    %cst_140 = arith.constant 5.000000e-01 : f32
    %345 = vector.broadcast %cst_140 : f32 to vector<8x128xf32>
    %346 = arith.addf %344, %345 : vector<8x128xf32>
    %347 = vector.extract_strided_slice %330 {offsets = [0, 256], sizes = [8, 128], strides = [1, 1]} : vector<8x512xf32> to vector<8x128xf32>
    %348 = math.tanh %347 : vector<8x128xf32>
    %349 = vector.extract_strided_slice %330 {offsets = [0, 384], sizes = [8, 128], strides = [1, 1]} : vector<8x512xf32> to vector<8x128xf32>
    %cst_141 = arith.constant 5.000000e-01 : f32
    %350 = vector.broadcast %cst_141 : f32 to vector<8x128xf32>
    %351 = arith.mulf %350, %349 : vector<8x128xf32>
    %352 = math.tanh %351 : vector<8x128xf32>
    %cst_142 = arith.constant 5.000000e-01 : f32
    %353 = vector.broadcast %cst_142 : f32 to vector<8x128xf32>
    %354 = arith.mulf %353, %352 : vector<8x128xf32>
    %cst_143 = arith.constant 5.000000e-01 : f32
    %355 = vector.broadcast %cst_143 : f32 to vector<8x128xf32>
    %356 = arith.addf %354, %355 : vector<8x128xf32>
    %357 = arith.mulf %346, %314 : vector<8x128xf32>
    %358 = arith.mulf %338, %348 : vector<8x128xf32>
    %359 = arith.addf %357, %358 : vector<8x128xf32>
    %360 = math.tanh %359 : vector<8x128xf32>
    %361 = arith.mulf %356, %360 : vector<8x128xf32>
    %c8_i32 = arith.constant 8 : i32
    %c0_144 = arith.constant 0 : index
    %c0_145 = arith.constant 0 : index
    %362 = vector.load %arg4[%c0_144, %c0_145] : memref<8x128xf32, #tpu.memory_space<vmem>>, vector<8x128xf32>
    tpu.vector_store %arg4[%c0_144, %c0_145], %361 {strides = array<i32>} : memref<8x128xf32, #tpu.memory_space<vmem>>, vector<8x128xf32>,
    return
  }
}

</mosaic_0001>

<llo_original>
// kernel: tpu_custom_call.1
$region0: #{tpu_custom_call.1}
  #allocation0 [shape = 'u32[]', space=smem, size = 0x4, offset = 0x4, fixed_abs, tag = 'smem constant byte address 0x4 - core index']
  #allocation1 [shape = 'u32[144,128]{1,0:T(1,128)}', space=vmem, size = 0x12000, scoped, tag = 'internal scratch']
  %s0 = inlined_call_operand.vmem [shape: f32[8,8,1], index: 0, kind: input, shape index: {}]
  %s1 = inlined_call_operand.vmem [shape: f32[1,512], index: 1, kind: input, shape index: {}]
  %s2 = inlined_call_operand.vmem [shape: f32[1,512], index: 2, kind: input, shape index: {}]
  %s3 = inlined_call_operand.hbm [shape: bf16[128,512], index: 3, kind: input, shape index: {}]
  %s4 = inlined_call_operand.hbm [shape: f32[8,128], index: 4, kind: output, shape index: {}]
  %s5 = sld [smem:[#allocation0]]
  $region30: #{tpu_custom_call.1} parent=0
    _
  %s7 = ssub.s32 1, %s5
  %s8 = scalar_select 0, %s7, %s5
  $region1: #{tpu_custom_call.1} parent=0
    #allocation2 [shape = 'u8[131072]{0}', space=vmem, size = 0x20000, scoped, tag = 'input window, operand 3, single buffered']
    #allocation3 [shape = 's32[1]{0}', space=sflag, size = 0x4, scoped, tag = 'scoped memory for tpu_custom_call.1']
    #allocation4 [shape = 's32[1]{0}', space=sflag, size = 0x4, scoped, tag = 'scoped memory for tpu_custom_call.1']
    #allocation5 [shape = 'u8[4096]{0}', space=vmem, size = 0x1000, scoped, tag = 'output window, operand 0, single buffered']
    %9 = vsyncpa [#allocation3], 0
    %10 = vsyncpa [#allocation4], 0
    // Predicated region
    $region2: #{tpu_custom_call.1} parent=1 // pred_check
      _
    $region3: #{tpu_custom_call.1} parent=1 // pred_check_branch
      %12 = sbr.rel (0) target = $region5
    $region4: #{tpu_custom_call.1} parent=1 // pred_region
      _
    $region5: #{tpu_custom_call.1} parent=1 // pred_fallthru
      _
    // Predicated region
    $region6: #{tpu_custom_call.1} parent=1 // pred_check
      _
    $region7: #{tpu_custom_call.1} parent=1 // pred_check_branch
      %14 = sbr.rel (0) target = $region9
    $region8: #{tpu_custom_call.1} parent=1 // pred_region
      _
    $region9: #{tpu_custom_call.1} parent=1 // pred_fallthru
      _
    // Predicated region
    $region10: #{tpu_custom_call.1} parent=1 // pred_check
      _
    $region11: #{tpu_custom_call.1} parent=1 // pred_check_branch
      %16 = sbr.rel (0) target = $region13
    $region12: #{tpu_custom_call.1} parent=1 // pred_region
      _
    $region13: #{tpu_custom_call.1} parent=1 // pred_fallthru
      _
    // Predicated region
    $region14: #{tpu_custom_call.1} parent=1 // pred_check
      _
    $region15: #{tpu_custom_call.1} parent=1 // pred_check_branch
      %18 = sbr.rel (0) target = $region17
    $region16: #{tpu_custom_call.1} parent=1 // pred_region
      %s20 = ssub.s32 4096, 4096
      %21 = vsyncadd [#allocation3], %s20
      %s22 = sshll.u32 [#allocation2], 4
      %s23 = int_to_ptr.vmem [resolvable:$true] %s22
      %28 = dma.hbm_to_vmem [thread:$0]  %s3, 4096, %s23, [#allocation3], 256, 256, 16
    $region17: #{tpu_custom_call.1} parent=1 // pred_fallthru
      _
    // Predicated region
    $region18: #{tpu_custom_call.1} parent=1 // pred_check
      _
    $region19: #{tpu_custom_call.1} parent=1 // pred_check_branch
      %30 = sbr.rel (0) target = $region21
    $region20: #{tpu_custom_call.1} parent=1 // pred_region
      %31 = dma.done [#allocation3], 4096
    $region21: #{tpu_custom_call.1} parent=1 // pred_fallthru
      _
    %v33 = vld [vmem:[%s0] sm:$0xff]
    %v34 = vld [vmem:[%s1] sm:$0xf]
    %36 = vset.pattern.permute.xlu0 0
    %37 = vperm.xlu0 %36, %v33
    %v38 = vpop.permute.xlu0 %37
    %v41 = vlaneseq
    %v42 = vshrl.u32 %v41, 7
    %v43 = vsub.s32 0, %v42
    %v44 = vrot.slane %v34, %v43
    %v45 = vlaneseq
    %v46 = vshrl.u32 %v45, 7
    %v47 = vsub.s32 1, %v46
    %v48 = vrot.slane %v34, %v47
    %v49 = vlaneseq
    %v50 = vshrl.u32 %v49, 7
    %v51 = vsub.s32 2, %v50
    %v52 = vrot.slane %v34, %v51
    %v53 = vlaneseq
    %v54 = vshrl.u32 %v53, 7
    %v55 = vsub.s32 3, %v54
    %v56 = vrot.slane %v34, %v55
    %v61 = vmul.f32 %v38, %v44
    %v62 = vmul.f32 %v38, %v48
    %v63 = vmul.f32 %v38, %v52
    %v64 = vmul.f32 %v38, %v56
    %v65 = vld [vmem:[%s2] sm:$0xf]
    %v67 = vlaneseq
    %v68 = vshrl.u32 %v67, 7
    %v69 = vsub.s32 0, %v68
    %v70 = vrot.slane %v65, %v69
    %v71 = vlaneseq
    %v72 = vshrl.u32 %v71, 7
    %v73 = vsub.s32 1, %v72
    %v74 = vrot.slane %v65, %v73
    %v75 = vlaneseq
    %v76 = vshrl.u32 %v75, 7
    %v77 = vsub.s32 2, %v76
    %v78 = vrot.slane %v65, %v77
    %v79 = vlaneseq
    %v80 = vshrl.u32 %v79, 7
    %v81 = vsub.s32 3, %v80
    %v82 = vrot.slane %v65, %v81
    %v87 = vadd.f32 %v61, %v70
    %v88 = vadd.f32 %v62, %v74
    %v89 = vadd.f32 %v63, %v78
    %v90 = vadd.f32 %v64, %v82
    %v91 = vld [vmem:[#allocation2] sm:$0xff]
    %v92 = vld [vmem:[#allocation2 + $0x8] sm:$0xff]
    %v93 = vld [vmem:[#allocation2 + $0x10] sm:$0xff]
    %v94 = vld [vmem:[#allocation2 + $0x18] sm:$0xff]
    %v95 = vld [vmem:[#allocation2 + $0x20] sm:$0xff]
    %v96 = vld [vmem:[#allocation2 + $0x28] sm:$0xff]
    %v97 = vld [vmem:[#allocation2 + $0x30] sm:$0xff]
    %v98 = vld [vmem:[#allocation2 + $0x38] sm:$0xff]
    %v99 = vld [vmem:[#allocation2 + $0x40] sm:$0xff]
    %v100 = vld [vmem:[#allocation2 + $0x48] sm:$0xff]
    %v101 = vld [vmem:[#allocation2 + $0x50] sm:$0xff]
    %v102 = vld [vmem:[#allocation2 + $0x58] sm:$0xff]
    %v103 = vld [vmem:[#allocation2 + $0x60] sm:$0xff]
    %v104 = vld [vmem:[#allocation2 + $0x68] sm:$0xff]
    %v105 = vld [vmem:[#allocation2 + $0x70] sm:$0xff]
    %v106 = vld [vmem:[#allocation2 + $0x78] sm:$0xff]
    %v107 = vld [vmem:[#allocation2 + $0x80] sm:$0xff]
    %v108 = vld [vmem:[#allocation2 + $0x88] sm:$0xff]
    %v109 = vld [vmem:[#allocation2 + $0x90] sm:$0xff]
    %v110 = vld [vmem:[#allocation2 + $0x98] sm:$0xff]
    %v111 = vld [vmem:[#allocation2 + $0xa0] sm:$0xff]
    %v112 = vld [vmem:[#allocation2 + $0xa8] sm:$0xff]
    %v113 = vld [vmem:[#allocation2 + $0xb0] sm:$0xff]
    %v114 = vld [vmem:[#allocation2 + $0xb8] sm:$0xff]
    %v115 = vld [vmem:[#allocation2 + $0xc0] sm:$0xff]
    %v116 = vld [vmem:[#allocation2 + $0xc8] sm:$0xff]
    %v117 = vld [vmem:[#allocation2 + $0xd0] sm:$0xff]
    %v118 = vld [vmem:[#allocation2 + $0xd8] sm:$0xff]
    %v119 = vld [vmem:[#allocation2 + $0xe0] sm:$0xff]
    %v120 = vld [vmem:[#allocation2 + $0xe8] sm:$0xff]
    %v121 = vld [vmem:[#allocation2 + $0xf0] sm:$0xff]
    %v122 = vld [vmem:[#allocation2 + $0xf8] sm:$0xff]
    %v155 = vunpack.c.l.b16 %v91
    %v156 = vunpack.c.h.b16 %v91
    %v157 = vunpack.c.l.b16 %v92
    %v158 = vunpack.c.h.b16 %v92
    %v159 = vunpack.c.l.b16 %v93
    %v160 = vunpack.c.h.b16 %v93
    %v161 = vunpack.c.l.b16 %v94
    %v162 = vunpack.c.h.b16 %v94
    %v163 = vunpack.c.l.b16 %v95
    %v164 = vunpack.c.h.b16 %v95
    %v165 = vunpack.c.l.b16 %v96
    %v166 = vunpack.c.h.b16 %v96
    %v167 = vunpack.c.l.b16 %v97
    %v168 = vunpack.c.h.b16 %v97
    %v169 = vunpack.c.l.b16 %v98
    %v170 = vunpack.c.h.b16 %v98
    %v171 = vunpack.c.l.b16 %v99
    %v172 = vunpack.c.h.b16 %v99
    %v173 = vunpack.c.l.b16 %v100
    %v174 = vunpack.c.h.b16 %v100
    %v175 = vunpack.c.l.b16 %v101
    %v176 = vunpack.c.h.b16 %v101
    %v177 = vunpack.c.l.b16 %v102
    %v178 = vunpack.c.h.b16 %v102
    %v179 = vunpack.c.l.b16 %v103
    %v180 = vunpack.c.h.b16 %v103
    %v181 = vunpack.c.l.b16 %v104
    %v182 = vunpack.c.h.b16 %v104
    %v183 = vunpack.c.l.b16 %v105
    %v184 = vunpack.c.h.b16 %v105
    %v185 = vunpack.c.l.b16 %v106
    %v186 = vunpack.c.h.b16 %v106
    %v187 = vunpack.c.l.b16 %v107
    %v188 = vunpack.c.h.b16 %v107
    %v189 = vunpack.c.l.b16 %v108
    %v190 = vunpack.c.h.b16 %v108
    %v191 = vunpack.c.l.b16 %v109
    %v192 = vunpack.c.h.b16 %v109
    %v193 = vunpack.c.l.b16 %v110
    %v194 = vunpack.c.h.b16 %v110
    %v195 = vunpack.c.l.b16 %v111
    %v196 = vunpack.c.h.b16 %v111
    %v197 = vunpack.c.l.b16 %v112
    %v198 = vunpack.c.h.b16 %v112
    %v199 = vunpack.c.l.b16 %v113
    %v200 = vunpack.c.h.b16 %v113
    %v201 = vunpack.c.l.b16 %v114
    %v202 = vunpack.c.h.b16 %v114
    %v203 = vunpack.c.l.b16 %v115
    %v204 = vunpack.c.h.b16 %v115
    %v205 = vunpack.c.l.b16 %v116
    %v206 = vunpack.c.h.b16 %v116
    %v207 = vunpack.c.l.b16 %v117
    %v208 = vunpack.c.h.b16 %v117
    %v209 = vunpack.c.l.b16 %v118
    %v210 = vunpack.c.h.b16 %v118
    %v211 = vunpack.c.l.b16 %v119
    %v212 = vunpack.c.h.b16 %v119
    %v213 = vunpack.c.l.b16 %v120
    %v214 = vunpack.c.h.b16 %v120
    %v215 = vunpack.c.l.b16 %v121
    %v216 = vunpack.c.h.b16 %v121
    %v217 = vunpack.c.l.b16 %v122
    %v218 = vunpack.c.h.b16 %v122
    %v219 = vpack.c.b16 %v159, %v155
    %v220 = vpack.c.b16 %v160, %v156
    %v221 = vpack.c.b16 %v161, %v157
    %v222 = vpack.c.b16 %v162, %v158
    %v223 = vpack.c.b16 %v167, %v163
    %v224 = vpack.c.b16 %v168, %v164
    %v225 = vpack.c.b16 %v169, %v165
    %v226 = vpack.c.b16 %v170, %v166
    %v227 = vpack.c.b16 %v175, %v171
    %v228 = vpack.c.b16 %v176, %v172
    %v229 = vpack.c.b16 %v177, %v173
    %v230 = vpack.c.b16 %v178, %v174
    %v231 = vpack.c.b16 %v183, %v179
    %v232 = vpack.c.b16 %v184, %v180
    %v233 = vpack.c.b16 %v185, %v181
    %v234 = vpack.c.b16 %v186, %v182
    %v235 = vpack.c.b16 %v191, %v187
    %v236 = vpack.c.b16 %v192, %v188
    %v237 = vpack.c.b16 %v193, %v189
    %v238 = vpack.c.b16 %v194, %v190
    %v239 = vpack.c.b16 %v199, %v195
    %v240 = vpack.c.b16 %v200, %v196
    %v241 = vpack.c.b16 %v201, %v197
    %v242 = vpack.c.b16 %v202, %v198
    %v243 = vpack.c.b16 %v207, %v203
    %v244 = vpack.c.b16 %v208, %v204
    %v245 = vpack.c.b16 %v209, %v205
    %v246 = vpack.c.b16 %v210, %v206
    %v247 = vpack.c.b16 %v215, %v211
    %v248 = vpack.c.b16 %v216, %v212
    %v249 = vpack.c.b16 %v217, %v213
    %v250 = vpack.c.b16 %v218, %v214
    %283 = vmatprep.subr.bf16.mxu0 %v220
    %284 = vmatpush1.bf16.msra.mxu0 %v219
    %285 = vmatprep.subr.bf16.mxu0 %v224
    %286 = vmatpush1.bf16.msra.mxu0 %v223
    %287 = vmatprep.subr.bf16.mxu0 %v228
    %288 = vmatpush1.bf16.msra.mxu0 %v227
    %289 = vmatprep.subr.bf16.mxu0 %v232
    %290 = vmatpush1.bf16.msra.mxu0 %v231
    %291 = vmatprep.subr.bf16.mxu0 %v236
    %292 = vmatpush1.bf16.msra.mxu0 %v235
    %293 = vmatprep.subr.bf16.mxu0 %v240
    %294 = vmatpush1.bf16.msra.mxu0 %v239
    %295 = vmatprep.subr.bf16.mxu0 %v244
    %296 = vmatpush1.bf16.msra.mxu0 %v243
    %297 = vmatprep.subr.bf16.mxu0 %v248
    %298 = vmatpush1.bf16.msra.mxu0 %v247
    %299 = vmatprep.subr.bf16.mxu0 0
    %300 = vmatpush1.bf16.msra.mxu0 0
    %301 = vmatprep.subr.bf16.mxu0 0
    %302 = vmatpush1.bf16.msra.mxu0 0
    %303 = vmatprep.subr.bf16.mxu0 0
    %304 = vmatpush1.bf16.msra.mxu0 0
    %305 = vmatprep.subr.bf16.mxu0 0
    %306 = vmatpush1.bf16.msra.mxu0 0
    %307 = vmatprep.subr.bf16.mxu0 0
    %308 = vmatpush1.bf16.msra.mxu0 0
    %309 = vmatprep.subr.bf16.mxu0 0
    %310 = vmatpush1.bf16.msra.mxu0 0
    %311 = vmatprep.subr.bf16.mxu0 0
    %312 = vmatpush1.bf16.msra.mxu0 0
    %313 = vmatprep.subr.bf16.mxu0 0
    %314 = vmatpush1.bf16.msra.mxu0 0
    %315 = vmatprep.mubr.bf16.mxu0 0
    %316 = vmatmul.mubr.bf16.gmra.mrb[0].mxu0 0
    %v317 = vpop.f32.mrb[0].mxu0
    %v318 = vadd.f32 0.0, %v317
    %v319 = vpop.f32.mrb[0].mxu0
    %v320 = vadd.f32 0.0, %v319
    %v321 = vpop.f32.mrb[0].mxu0
    %v322 = vpop.f32.mrb[0].mxu0
    %323 = vdwg.mxu0
    %324 = vmatprep.subr.bf16.mxu0 %v222
    %325 = vmatpush1.bf16.msra.mxu0 %v221
    %326 = vmatprep.subr.bf16.mxu0 %v226
    %327 = vmatpush1.bf16.msra.mxu0 %v225
    %328 = vmatprep.subr.bf16.mxu0 %v230
    %329 = vmatpush1.bf16.msra.mxu0 %v229
    %330 = vmatprep.subr.bf16.mxu0 %v234
    %331 = vmatpush1.bf16.msra.mxu0 %v233
    %332 = vmatprep.subr.bf16.mxu0 %v238
    %333 = vmatpush1.bf16.msra.mxu0 %v237
    %334 = vmatprep.subr.bf16.mxu0 %v242
    %335 = vmatpush1.bf16.msra.mxu0 %v241
    %336 = vmatprep.subr.bf16.mxu0 %v246
    %337 = vmatpush1.bf16.msra.mxu0 %v245
    %338 = vmatprep.subr.bf16.mxu0 %v250
    %339 = vmatpush1.bf16.msra.mxu0 %v249
    %340 = vmatprep.subr.bf16.mxu0 0
    %341 = vmatpush1.bf16.msra.mxu0 0
    %342 = vmatprep.subr.bf16.mxu0 0
    %343 = vmatpush1.bf16.msra.mxu0 0
    %344 = vmatprep.subr.bf16.mxu0 0
    %345 = vmatpush1.bf16.msra.mxu0 0
    %346 = vmatprep.subr.bf16.mxu0 0
    %347 = vmatpush1.bf16.msra.mxu0 0
    %348 = vmatprep.subr.bf16.mxu0 0
    %349 = vmatpush1.bf16.msra.mxu0 0
    %350 = vmatprep.subr.bf16.mxu0 0
    %351 = vmatpush1.bf16.msra.mxu0 0
    %352 = vmatprep.subr.bf16.mxu0 0
    %353 = vmatpush1.bf16.msra.mxu0 0
    %354 = vmatprep.subr.bf16.mxu0 0
    %355 = vmatpush1.bf16.msra.mxu0 0
    %356 = vmatprep.mubr.bf16.mxu0 0
    %357 = vmatmul.mubr.bf16.gmra.mrb[0].mxu0 0
    %v358 = vpop.f32.mrb[0].mxu0
    %v359 = vadd.f32 0.0, %v358
    %v360 = vpop.f32.mrb[0].mxu0
    %v361 = vadd.f32 0.0, %v360
    %v362 = vpop.f32.mrb[0].mxu0
    %v363 = vpop.f32.mrb[0].mxu0
    %364 = vdwg.mxu0
    %v365 = vadd.f32 %v87, %v318
    %v366 = vadd.f32 %v88, %v320
    %v367 = vadd.f32 %v89, %v359
    %v368 = vadd.f32 %v90, %v361
    %v369 = vmul.f32 %v365, 0.5
    %v370 = vtanh.pop %v369
    %v371 = vmul.f32 %v370, 0.5
    %v372 = vadd.f32 %v371, 0.5
    %v373 = vmul.f32 %v366, 0.5
    %v374 = vtanh.pop %v373
    %v375 = vmul.f32 %v374, 0.5
    %v376 = vadd.f32 %v375, 0.5
    %v377 = vtanh.pop %v367
    %v378 = vmul.f32 %v368, 0.5
    %v379 = vtanh.pop %v378
    %v380 = vmul.f32 %v379, 0.5
    %v381 = vadd.f32 %v380, 0.5
    %v382 = vmul.f32 %v376, 0.0
    %v383 = vmul.f32 %v372, %v377
    %v384 = vadd.f32 %v382, %v383
    %v385 = vtanh.pop %v384
    %v386 = vmul.f32 %v381, %v385
    %s387 = scalar_lea.vmem %s0, 8
    %v388 = vld [vmem:[%s387] sm:$0xff]
    %390 = vset.pattern.permute.xlu0 0
    %391 = vperm.xlu0 %390, %v388
    %v392 = vpop.permute.xlu0 %391
    %v394 = vmul.f32 %v392, %v44
    %v395 = vmul.f32 %v392, %v48
    %v396 = vmul.f32 %v392, %v52
    %v397 = vmul.f32 %v392, %v56
    %v398 = vadd.f32 %v394, %v70
    %v399 = vadd.f32 %v395, %v74
    %v400 = vadd.f32 %v396, %v78
    %v401 = vadd.f32 %v397, %v82
    %v402 = vpack.c.bf16 %v386, %v386
    %403 = vmatprep.subr.bf16.mxu0 %v220
    %404 = vmatpush1.bf16.msra.mxu0 %v219
    %405 = vmatprep.subr.bf16.mxu0 %v224
    %406 = vmatpush1.bf16.msra.mxu0 %v223
    %407 = vmatprep.subr.bf16.mxu0 %v228
    %408 = vmatpush1.bf16.msra.mxu0 %v227
    %409 = vmatprep.subr.bf16.mxu0 %v232
    %410 = vmatpush1.bf16.msra.mxu0 %v231
    %411 = vmatprep.subr.bf16.mxu0 %v236
    %412 = vmatpush1.bf16.msra.mxu0 %v235
    %413 = vmatprep.subr.bf16.mxu0 %v240
    %414 = vmatpush1.bf16.msra.mxu0 %v239
    %415 = vmatprep.subr.bf16.mxu0 %v244
    %416 = vmatpush1.bf16.msra.mxu0 %v243
    %417 = vmatprep.subr.bf16.mxu0 %v248
    %418 = vmatpush1.bf16.msra.mxu0 %v247
    %419 = vmatprep.subr.bf16.mxu0 0
    %420 = vmatpush1.bf16.msra.mxu0 0
    %421 = vmatprep.subr.bf16.mxu0 0
    %422 = vmatpush1.bf16.msra.mxu0 0
    %423 = vmatprep.subr.bf16.mxu0 0
    %424 = vmatpush1.bf16.msra.mxu0 0
    %425 = vmatprep.subr.bf16.mxu0 0
    %426 = vmatpush1.bf16.msra.mxu0 0
    %427 = vmatprep.subr.bf16.mxu0 0
    %428 = vmatpush1.bf16.msra.mxu0 0
    %429 = vmatprep.subr.bf16.mxu0 0
    %430 = vmatpush1.bf16.msra.mxu0 0
    %431 = vmatprep.subr.bf16.mxu0 0
    %432 = vmatpush1.bf16.msra.mxu0 0
    %433 = vmatprep.subr.bf16.mxu0 0
    %434 = vmatpush1.bf16.msra.mxu0 0
    %435 = vmatprep.mubr.bf16.mxu0 0
    %436 = vmatmul.mubr.bf16.gmra.mrb[0].mxu0 %v402
    %v437 = vpop.f32.mrb[0].mxu0
    %v438 = vadd.f32 0.0, %v437
    %v439 = vpop.f32.mrb[0].mxu0
    %v440 = vadd.f32 0.0, %v439
    %v441 = vpop.f32.mrb[0].mxu0
    %v442 = vpop.f32.mrb[0].mxu0
    %443 = vdwg.mxu0
    %444 = vmatprep.subr.bf16.mxu0 %v222
    %445 = vmatpush1.bf16.msra.mxu0 %v221
    %446 = vmatprep.subr.bf16.mxu0 %v226
    %447 = vmatpush1.bf16.msra.mxu0 %v225
    %448 = vmatprep.subr.bf16.mxu0 %v230
    %449 = vmatpush1.bf16.msra.mxu0 %v229
    %450 = vmatprep.subr.bf16.mxu0 %v234
    %451 = vmatpush1.bf16.msra.mxu0 %v233
    %452 = vmatprep.subr.bf16.mxu0 %v238
    %453 = vmatpush1.bf16.msra.mxu0 %v237
    %454 = vmatprep.subr.bf16.mxu0 %v242
    %455 = vmatpush1.bf16.msra.mxu0 %v241
    %456 = vmatprep.subr.bf16.mxu0 %v246
    %457 = vmatpush1.bf16.msra.mxu0 %v245
    %458 = vmatprep.subr.bf16.mxu0 %v250
    %459 = vmatpush1.bf16.msra.mxu0 %v249
    %460 = vmatprep.subr.bf16.mxu0 0
    %461 = vmatpush1.bf16.msra.mxu0 0
    %462 = vmatprep.subr.bf16.mxu0 0
    %463 = vmatpush1.bf16.msra.mxu0 0
    %464 = vmatprep.subr.bf16.mxu0 0
    %465 = vmatpush1.bf16.msra.mxu0 0
    %466 = vmatprep.subr.bf16.mxu0 0
    %467 = vmatpush1.bf16.msra.mxu0 0
    %468 = vmatprep.subr.bf16.mxu0 0
    %469 = vmatpush1.bf16.msra.mxu0 0
    %470 = vmatprep.subr.bf16.mxu0 0
    %471 = vmatpush1.bf16.msra.mxu0 0
    %472 = vmatprep.subr.bf16.mxu0 0
    %473 = vmatpush1.bf16.msra.mxu0 0
    %474 = vmatprep.subr.bf16.mxu0 0
    %475 = vmatpush1.bf16.msra.mxu0 0
    %476 = vmatprep.mubr.bf16.mxu0 0
    %477 = vmatmul.mubr.bf16.gmra.mrb[0].mxu0 %v402
    %v478 = vpop.f32.mrb[0].mxu0
    %v479 = vadd.f32 0.0, %v478
    %v480 = vpop.f32.mrb[0].mxu0
    %v481 = vadd.f32 0.0, %v480
    %v482 = vpop.f32.mrb[0].mxu0
    %v483 = vpop.f32.mrb[0].mxu0
    %484 = vdwg.mxu0
    %v485 = vadd.f32 %v398, %v438
    %v486 = vadd.f32 %v399, %v440
    %v487 = vadd.f32 %v400, %v479
    %v488 = vadd.f32 %v401, %v481
    %v489 = vmul.f32 %v485, 0.5
    %v490 = vtanh.pop %v489
    %v491 = vmul.f32 %v490, 0.5
    %v492 = vadd.f32 %v491, 0.5
    %v493 = vmul.f32 %v486, 0.5
    %v494 = vtanh.pop %v493
    %v495 = vmul.f32 %v494, 0.5
    %v496 = vadd.f32 %v495, 0.5
    %v497 = vtanh.pop %v487
    %v498 = vmul.f32 %v488, 0.5
    %v499 = vtanh.pop %v498
    %v500 = vmul.f32 %v499, 0.5
    %v501 = vadd.f32 %v500, 0.5
    %v502 = vmul.f32 %v496, %v384
    %v503 = vmul.f32 %v492, %v497
    %v504 = vadd.f32 %v502, %v503
    %v505 = vtanh.pop %v504
    %v506 = vmul.f32 %v501, %v505
    %s507 = scalar_lea.vmem %s0, 16
    %v508 = vld [vmem:[%s507] sm:$0xff]
    %510 = vset.pattern.permute.xlu0 0
    %511 = vperm.xlu0 %510, %v508
    %v512 = vpop.permute.xlu0 %511
    %v514 = vmul.f32 %v512, %v44
    %v515 = vmul.f32 %v512, %v48
    %v516 = vmul.f32 %v512, %v52
    %v517 = vmul.f32 %v512, %v56
    %v518 = vadd.f32 %v514, %v70
    %v519 = vadd.f32 %v515, %v74
    %v520 = vadd.f32 %v516, %v78
    %v521 = vadd.f32 %v517, %v82
    %v522 = vpack.c.bf16 %v506, %v506
    %523 = vmatprep.subr.bf16.mxu0 %v220
    %524 = vmatpush1.bf16.msra.mxu0 %v219
    %525 = vmatprep.subr.bf16.mxu0 %v224
    %526 = vmatpush1.bf16.msra.mxu0 %v223
    %527 = vmatprep.subr.bf16.mxu0 %v228
    %528 = vmatpush1.bf16.msra.mxu0 %v227
    %529 = vmatprep.subr.bf16.mxu0 %v232
    %530 = vmatpush1.bf16.msra.mxu0 %v231
    %531 = vmatprep.subr.bf16.mxu0 %v236
    %532 = vmatpush1.bf16.msra.mxu0 %v235
    %533 = vmatprep.subr.bf16.mxu0 %v240
    %534 = vmatpush1.bf16.msra.mxu0 %v239
    %535 = vmatprep.subr.bf16.mxu0 %v244
    %536 = vmatpush1.bf16.msra.mxu0 %v243
    %537 = vmatprep.subr.bf16.mxu0 %v248
    %538 = vmatpush1.bf16.msra.mxu0 %v247
    %539 = vmatprep.subr.bf16.mxu0 0
    %540 = vmatpush1.bf16.msra.mxu0 0
    %541 = vmatprep.subr.bf16.mxu0 0
    %542 = vmatpush1.bf16.msra.mxu0 0
    %543 = vmatprep.subr.bf16.mxu0 0
    %544 = vmatpush1.bf16.msra.mxu0 0
    %545 = vmatprep.subr.bf16.mxu0 0
    %546 = vmatpush1.bf16.msra.mxu0 0
    %547 = vmatprep.subr.bf16.mxu0 0
    %548 = vmatpush1.bf16.msra.mxu0 0
    %549 = vmatprep.subr.bf16.mxu0 0
    %550 = vmatpush1.bf16.msra.mxu0 0
    %551 = vmatprep.subr.bf16.mxu0 0
    %552 = vmatpush1.bf16.msra.mxu0 0
    %553 = vmatprep.subr.bf16.mxu0 0
    %554 = vmatpush1.bf16.msra.mxu0 0
    %555 = vmatprep.mubr.bf16.mxu0 0
    %556 = vmatmul.mubr.bf16.gmra.mrb[0].mxu0 %v522
    %v557 = vpop.f32.mrb[0].mxu0
    %v558 = vadd.f32 0.0, %v557
    %v559 = vpop.f32.mrb[0].mxu0
    %v560 = vadd.f32 0.0, %v559
    %v561 = vpop.f32.mrb[0].mxu0
    %v562 = vpop.f32.mrb[0].mxu0
    %563 = vdwg.mxu0
    %564 = vmatprep.subr.bf16.mxu0 %v222
    %565 = vmatpush1.bf16.msra.mxu0 %v221
    %566 = vmatprep.subr.bf16.mxu0 %v226
    %567 = vmatpush1.bf16.msra.mxu0 %v225
    %568 = vmatprep.subr.bf16.mxu0 %v230
    %569 = vmatpush1.bf16.msra.mxu0 %v229
    %570 = vmatprep.subr.bf16.mxu0 %v234
    %571 = vmatpush1.bf16.msra.mxu0 %v233
    %572 = vmatprep.subr.bf16.mxu0 %v238
    %573 = vmatpush1.bf16.msra.mxu0 %v237
    %574 = vmatprep.subr.bf16.mxu0 %v242
    %575 = vmatpush1.bf16.msra.mxu0 %v241
    %576 = vmatprep.subr.bf16.mxu0 %v246
    %577 = vmatpush1.bf16.msra.mxu0 %v245
    %578 = vmatprep.subr.bf16.mxu0 %v250
    %579 = vmatpush1.bf16.msra.mxu0 %v249
    %580 = vmatprep.subr.bf16.mxu0 0
    %581 = vmatpush1.bf16.msra.mxu0 0
    %582 = vmatprep.subr.bf16.mxu0 0
    %583 = vmatpush1.bf16.msra.mxu0 0
    %584 = vmatprep.subr.bf16.mxu0 0
    %585 = vmatpush1.bf16.msra.mxu0 0
    %586 = vmatprep.subr.bf16.mxu0 0
    %587 = vmatpush1.bf16.msra.mxu0 0
    %588 = vmatprep.subr.bf16.mxu0 0
    %589 = vmatpush1.bf16.msra.mxu0 0
    %590 = vmatprep.subr.bf16.mxu0 0
    %591 = vmatpush1.bf16.msra.mxu0 0
    %592 = vmatprep.subr.bf16.mxu0 0
    %593 = vmatpush1.bf16.msra.mxu0 0
    %594 = vmatprep.subr.bf16.mxu0 0
    %595 = vmatpush1.bf16.msra.mxu0 0
    %596 = vmatprep.mubr.bf16.mxu0 0
    %597 = vmatmul.mubr.bf16.gmra.mrb[0].mxu0 %v522
    %v598 = vpop.f32.mrb[0].mxu0
    %v599 = vadd.f32 0.0, %v598
    %v600 = vpop.f32.mrb[0].mxu0
    %v601 = vadd.f32 0.0, %v600
    %v602 = vpop.f32.mrb[0].mxu0
    %v603 = vpop.f32.mrb[0].mxu0
    %604 = vdwg.mxu0
    %v605 = vadd.f32 %v518, %v558
    %v606 = vadd.f32 %v519, %v560
    %v607 = vadd.f32 %v520, %v599
    %v608 = vadd.f32 %v521, %v601
    %v609 = vmul.f32 %v605, 0.5
    %v610 = vtanh.pop %v609
    %v611 = vmul.f32 %v610, 0.5
    %v612 = vadd.f32 %v611, 0.5
    %v613 = vmul.f32 %v606, 0.5
    %v614 = vtanh.pop %v613
    %v615 = vmul.f32 %v614, 0.5
    %v616 = vadd.f32 %v615, 0.5
    %v617 = vtanh.pop %v607
    %v618 = vmul.f32 %v608, 0.5
    %v619 = vtanh.pop %v618
    %v620 = vmul.f32 %v619, 0.5
    %v621 = vadd.f32 %v620, 0.5
    %v622 = vmul.f32 %v616, %v504
    %v623 = vmul.f32 %v612, %v617
    %v624 = vadd.f32 %v622, %v623
    %v625 = vtanh.pop %v624
    %v626 = vmul.f32 %v621, %v625
    %s627 = scalar_lea.vmem %s0, 24
    %v628 = vld [vmem:[%s627] sm:$0xff]
    %630 = vset.pattern.permute.xlu0 0
    %631 = vperm.xlu0 %630, %v628
    %v632 = vpop.permute.xlu0 %631
    %v634 = vmul.f32 %v632, %v44
    %v635 = vmul.f32 %v632, %v48
    %v636 = vmul.f32 %v632, %v52
    %v637 = vmul.f32 %v632, %v56
    %v638 = vadd.f32 %v634, %v70
    %v639 = vadd.f32 %v635, %v74
    %v640 = vadd.f32 %v636, %v78
    %v641 = vadd.f32 %v637, %v82
    %v642 = vpack.c.bf16 %v626, %v626
    %643 = vmatprep.subr.bf16.mxu0 %v220
    %644 = vmatpush1.bf16.msra.mxu0 %v219
    %645 = vmatprep.subr.bf16.mxu0 %v224
    %646 = vmatpush1.bf16.msra.mxu0 %v223
    %647 = vmatprep.subr.bf16.mxu0 %v228
    %648 = vmatpush1.bf16.msra.mxu0 %v227
    %649 = vmatprep.subr.bf16.mxu0 %v232
    %650 = vmatpush1.bf16.msra.mxu0 %v231
    %651 = vmatprep.subr.bf16.mxu0 %v236
    %652 = vmatpush1.bf16.msra.mxu0 %v235
    %653 = vmatprep.subr.bf16.mxu0 %v240
    %654 = vmatpush1.bf16.msra.mxu0 %v239
    %655 = vmatprep.subr.bf16.mxu0 %v244
    %656 = vmatpush1.bf16.msra.mxu0 %v243
    %657 = vmatprep.subr.bf16.mxu0 %v248
    %658 = vmatpush1.bf16.msra.mxu0 %v247
    %659 = vmatprep.subr.bf16.mxu0 0
    %660 = vmatpush1.bf16.msra.mxu0 0
    %661 = vmatprep.subr.bf16.mxu0 0
    %662 = vmatpush1.bf16.msra.mxu0 0
    %663 = vmatprep.subr.bf16.mxu0 0
    %664 = vmatpush1.bf16.msra.mxu0 0
    %665 = vmatprep.subr.bf16.mxu0 0
    %666 = vmatpush1.bf16.msra.mxu0 0
    %667 = vmatprep.subr.bf16.mxu0 0
    %668 = vmatpush1.bf16.msra.mxu0 0
    %669 = vmatprep.subr.bf16.mxu0 0
    %670 = vmatpush1.bf16.msra.mxu0 0
    %671 = vmatprep.subr.bf16.mxu0 0
    %672 = vmatpush1.bf16.msra.mxu0 0
    %673 = vmatprep.subr.bf16.mxu0 0
    %674 = vmatpush1.bf16.msra.mxu0 0
    %675 = vmatprep.mubr.bf16.mxu0 0
    %676 = vmatmul.mubr.bf16.gmra.mrb[0].mxu0 %v642
    %v677 = vpop.f32.mrb[0].mxu0
    %v678 = vadd.f32 0.0, %v677
    %v679 = vpop.f32.mrb[0].mxu0
    %v680 = vadd.f32 0.0, %v679
    %v681 = vpop.f32.mrb[0].mxu0
    %v682 = vpop.f32.mrb[0].mxu0
    %683 = vdwg.mxu0
    %684 = vmatprep.subr.bf16.mxu0 %v222
    %685 = vmatpush1.bf16.msra.mxu0 %v221
    %686 = vmatprep.subr.bf16.mxu0 %v226
    %687 = vmatpush1.bf16.msra.mxu0 %v225
    %688 = vmatprep.subr.bf16.mxu0 %v230
    %689 = vmatpush1.bf16.msra.mxu0 %v229
    %690 = vmatprep.subr.bf16.mxu0 %v234
    %691 = vmatpush1.bf16.msra.mxu0 %v233
    %692 = vmatprep.subr.bf16.mxu0 %v238
    %693 = vmatpush1.bf16.msra.mxu0 %v237
    %694 = vmatprep.subr.bf16.mxu0 %v242
    %695 = vmatpush1.bf16.msra.mxu0 %v241
    %696 = vmatprep.subr.bf16.mxu0 %v246
    %697 = vmatpush1.bf16.msra.mxu0 %v245
    %698 = vmatprep.subr.bf16.mxu0 %v250
    %699 = vmatpush1.bf16.msra.mxu0 %v249
    %700 = vmatprep.subr.bf16.mxu0 0
    %701 = vmatpush1.bf16.msra.mxu0 0
    %702 = vmatprep.subr.bf16.mxu0 0
    %703 = vmatpush1.bf16.msra.mxu0 0
    %704 = vmatprep.subr.bf16.mxu0 0
    %705 = vmatpush1.bf16.msra.mxu0 0
    %706 = vmatprep.subr.bf16.mxu0 0
    %707 = vmatpush1.bf16.msra.mxu0 0
    %708 = vmatprep.subr.bf16.mxu0 0
    %709 = vmatpush1.bf16.msra.mxu0 0
    %710 = vmatprep.subr.bf16.mxu0 0
    %711 = vmatpush1.bf16.msra.mxu0 0
    %712 = vmatprep.subr.bf16.mxu0 0
    %713 = vmatpush1.bf16.msra.mxu0 0
    %714 = vmatprep.subr.bf16.mxu0 0
    %715 = vmatpush1.bf16.msra.mxu0 0
    %716 = vmatprep.mubr.bf16.mxu0 0
    %717 = vmatmul.mubr.bf16.gmra.mrb[0].mxu0 %v642
    %v718 = vpop.f32.mrb[0].mxu0
    %v719 = vadd.f32 0.0, %v718
    %v720 = vpop.f32.mrb[0].mxu0
    %v721 = vadd.f32 0.0, %v720
    %v722 = vpop.f32.mrb[0].mxu0
    %v723 = vpop.f32.mrb[0].mxu0
    %724 = vdwg.mxu0
    %v725 = vadd.f32 %v638, %v678
    %v726 = vadd.f32 %v639, %v680
    %v727 = vadd.f32 %v640, %v719
    %v728 = vadd.f32 %v641, %v721
    %v729 = vmul.f32 %v725, 0.5
    %v730 = vtanh.pop %v729
    %v731 = vmul.f32 %v730, 0.5
    %v732 = vadd.f32 %v731, 0.5
    %v733 = vmul.f32 %v726, 0.5
    %v734 = vtanh.pop %v733
    %v735 = vmul.f32 %v734, 0.5
    %v736 = vadd.f32 %v735, 0.5
    %v737 = vtanh.pop %v727
    %v738 = vmul.f32 %v728, 0.5
    %v739 = vtanh.pop %v738
    %v740 = vmul.f32 %v739, 0.5
    %v741 = vadd.f32 %v740, 0.5
    %v742 = vmul.f32 %v736, %v624
    %v743 = vmul.f32 %v732, %v737
    %v744 = vadd.f32 %v742, %v743
    %v745 = vtanh.pop %v744
    %v746 = vmul.f32 %v741, %v745
    %s747 = scalar_lea.vmem %s0, 32
    %v748 = vld [vmem:[%s747] sm:$0xff]
    %750 = vset.pattern.permute.xlu0 0
    %751 = vperm.xlu0 %750, %v748
    %v752 = vpop.permute.xlu0 %751
    %v754 = vmul.f32 %v752, %v44
    %v755 = vmul.f32 %v752, %v48
    %v756 = vmul.f32 %v752, %v52
    %v757 = vmul.f32 %v752, %v56
    %v758 = vadd.f32 %v754, %v70
    %v759 = vadd.f32 %v755, %v74
    %v760 = vadd.f32 %v756, %v78
    %v761 = vadd.f32 %v757, %v82
    %v762 = vpack.c.bf16 %v746, %v746
    %763 = vmatprep.subr.bf16.mxu0 %v220
    %764 = vmatpush1.bf16.msra.mxu0 %v219
    %765 = vmatprep.subr.bf16.mxu0 %v224
    %766 = vmatpush1.bf16.msra.mxu0 %v223
    %767 = vmatprep.subr.bf16.mxu0 %v228
    %768 = vmatpush1.bf16.msra.mxu0 %v227
    %769 = vmatprep.subr.bf16.mxu0 %v232
    %770 = vmatpush1.bf16.msra.mxu0 %v231
    %771 = vmatprep.subr.bf16.mxu0 %v236
    %772 = vmatpush1.bf16.msra.mxu0 %v235
    %773 = vmatprep.subr.bf16.mxu0 %v240
    %774 = vmatpush1.bf16.msra.mxu0 %v239
    %775 = vmatprep.subr.bf16.mxu0 %v244
    %776 = vmatpush1.bf16.msra.mxu0 %v243
    %777 = vmatprep.subr.bf16.mxu0 %v248
    %778 = vmatpush1.bf16.msra.mxu0 %v247
    %779 = vmatprep.subr.bf16.mxu0 0
    %780 = vmatpush1.bf16.msra.mxu0 0
    %781 = vmatprep.subr.bf16.mxu0 0
    %782 = vmatpush1.bf16.msra.mxu0 0
    %783 = vmatprep.subr.bf16.mxu0 0
    %784 = vmatpush1.bf16.msra.mxu0 0
    %785 = vmatprep.subr.bf16.mxu0 0
    %786 = vmatpush1.bf16.msra.mxu0 0
    %787 = vmatprep.subr.bf16.mxu0 0
    %788 = vmatpush1.bf16.msra.mxu0 0
    %789 = vmatprep.subr.bf16.mxu0 0
    %790 = vmatpush1.bf16.msra.mxu0 0
    %791 = vmatprep.subr.bf16.mxu0 0
    %792 = vmatpush1.bf16.msra.mxu0 0
    %793 = vmatprep.subr.bf16.mxu0 0
    %794 = vmatpush1.bf16.msra.mxu0 0
    %795 = vmatprep.mubr.bf16.mxu0 0
    %796 = vmatmul.mubr.bf16.gmra.mrb[0].mxu0 %v762
    %v797 = vpop.f32.mrb[0].mxu0
    %v798 = vadd.f32 0.0, %v797
    %v799 = vpop.f32.mrb[0].mxu0
    %v800 = vadd.f32 0.0, %v799
    %v801 = vpop.f32.mrb[0].mxu0
    %v802 = vpop.f32.mrb[0].mxu0
    %803 = vdwg.mxu0
    %804 = vmatprep.subr.bf16.mxu0 %v222
    %805 = vmatpush1.bf16.msra.mxu0 %v221
    %806 = vmatprep.subr.bf16.mxu0 %v226
    %807 = vmatpush1.bf16.msra.mxu0 %v225
    %808 = vmatprep.subr.bf16.mxu0 %v230
    %809 = vmatpush1.bf16.msra.mxu0 %v229
    %810 = vmatprep.subr.bf16.mxu0 %v234
    %811 = vmatpush1.bf16.msra.mxu0 %v233
    %812 = vmatprep.subr.bf16.mxu0 %v238
    %813 = vmatpush1.bf16.msra.mxu0 %v237
    %814 = vmatprep.subr.bf16.mxu0 %v242
    %815 = vmatpush1.bf16.msra.mxu0 %v241
    %816 = vmatprep.subr.bf16.mxu0 %v246
    %817 = vmatpush1.bf16.msra.mxu0 %v245
    %818 = vmatprep.subr.bf16.mxu0 %v250
    %819 = vmatpush1.bf16.msra.mxu0 %v249
    %820 = vmatprep.subr.bf16.mxu0 0
    %821 = vmatpush1.bf16.msra.mxu0 0
    %822 = vmatprep.subr.bf16.mxu0 0
    %823 = vmatpush1.bf16.msra.mxu0 0
    %824 = vmatprep.subr.bf16.mxu0 0
    %825 = vmatpush1.bf16.msra.mxu0 0
    %826 = vmatprep.subr.bf16.mxu0 0
    %827 = vmatpush1.bf16.msra.mxu0 0
    %828 = vmatprep.subr.bf16.mxu0 0
    %829 = vmatpush1.bf16.msra.mxu0 0
    %830 = vmatprep.subr.bf16.mxu0 0
    %831 = vmatpush1.bf16.msra.mxu0 0
    %832 = vmatprep.subr.bf16.mxu0 0
    %833 = vmatpush1.bf16.msra.mxu0 0
    %834 = vmatprep.subr.bf16.mxu0 0
    %835 = vmatpush1.bf16.msra.mxu0 0
    %836 = vmatprep.mubr.bf16.mxu0 0
    %837 = vmatmul.mubr.bf16.gmra.mrb[0].mxu0 %v762
    %v838 = vpop.f32.mrb[0].mxu0
    %v839 = vadd.f32 0.0, %v838
    %v840 = vpop.f32.mrb[0].mxu0
    %v841 = vadd.f32 0.0, %v840
    %v842 = vpop.f32.mrb[0].mxu0
    %v843 = vpop.f32.mrb[0].mxu0
    %844 = vdwg.mxu0
    %v845 = vadd.f32 %v758, %v798
    %v846 = vadd.f32 %v759, %v800
    %v847 = vadd.f32 %v760, %v839
    %v848 = vadd.f32 %v761, %v841
    %v849 = vmul.f32 %v845, 0.5
    %v850 = vtanh.pop %v849
    %v851 = vmul.f32 %v850, 0.5
    %v852 = vadd.f32 %v851, 0.5
    %v853 = vmul.f32 %v846, 0.5
    %v854 = vtanh.pop %v853
    %v855 = vmul.f32 %v854, 0.5
    %v856 = vadd.f32 %v855, 0.5
    %v857 = vtanh.pop %v847
    %v858 = vmul.f32 %v848, 0.5
    %v859 = vtanh.pop %v858
    %v860 = vmul.f32 %v859, 0.5
    %v861 = vadd.f32 %v860, 0.5
    %v862 = vmul.f32 %v856, %v744
    %v863 = vmul.f32 %v852, %v857
    %v864 = vadd.f32 %v862, %v863
    %v865 = vtanh.pop %v864
    %v866 = vmul.f32 %v861, %v865
    %s867 = scalar_lea.vmem %s0, 40
    %v868 = vld [vmem:[%s867] sm:$0xff]
    %870 = vset.pattern.permute.xlu0 0
    %871 = vperm.xlu0 %870, %v868
    %v872 = vpop.permute.xlu0 %871
    %v874 = vmul.f32 %v872, %v44
    %v875 = vmul.f32 %v872, %v48
    %v876 = vmul.f32 %v872, %v52
    %v877 = vmul.f32 %v872, %v56
    %v878 = vadd.f32 %v874, %v70
    %v879 = vadd.f32 %v875, %v74
    %v880 = vadd.f32 %v876, %v78
    %v881 = vadd.f32 %v877, %v82
    %v882 = vpack.c.bf16 %v866, %v866
    %883 = vmatprep.subr.bf16.mxu0 %v220
    %884 = vmatpush1.bf16.msra.mxu0 %v219
    %885 = vmatprep.subr.bf16.mxu0 %v224
    %886 = vmatpush1.bf16.msra.mxu0 %v223
    %887 = vmatprep.subr.bf16.mxu0 %v228
    %888 = vmatpush1.bf16.msra.mxu0 %v227
    %889 = vmatprep.subr.bf16.mxu0 %v232
    %890 = vmatpush1.bf16.msra.mxu0 %v231
    %891 = vmatprep.subr.bf16.mxu0 %v236
    %892 = vmatpush1.bf16.msra.mxu0 %v235
    %893 = vmatprep.subr.bf16.mxu0 %v240
    %894 = vmatpush1.bf16.msra.mxu0 %v239
    %895 = vmatprep.subr.bf16.mxu0 %v244
    %896 = vmatpush1.bf16.msra.mxu0 %v243
    %897 = vmatprep.subr.bf16.mxu0 %v248
    %898 = vmatpush1.bf16.msra.mxu0 %v247
    %899 = vmatprep.subr.bf16.mxu0 0
    %900 = vmatpush1.bf16.msra.mxu0 0
    %901 = vmatprep.subr.bf16.mxu0 0
    %902 = vmatpush1.bf16.msra.mxu0 0
    %903 = vmatprep.subr.bf16.mxu0 0
    %904 = vmatpush1.bf16.msra.mxu0 0
    %905 = vmatprep.subr.bf16.mxu0 0
    %906 = vmatpush1.bf16.msra.mxu0 0
    %907 = vmatprep.subr.bf16.mxu0 0
    %908 = vmatpush1.bf16.msra.mxu0 0
    %909 = vmatprep.subr.bf16.mxu0 0
    %910 = vmatpush1.bf16.msra.mxu0 0
    %911 = vmatprep.subr.bf16.mxu0 0
    %912 = vmatpush1.bf16.msra.mxu0 0
    %913 = vmatprep.subr.bf16.mxu0 0
    %914 = vmatpush1.bf16.msra.mxu0 0
    %915 = vmatprep.mubr.bf16.mxu0 0
    %916 = vmatmul.mubr.bf16.gmra.mrb[0].mxu0 %v882
    %v917 = vpop.f32.mrb[0].mxu0
    %v918 = vadd.f32 0.0, %v917
    %v919 = vpop.f32.mrb[0].mxu0
    %v920 = vadd.f32 0.0, %v919
    %v921 = vpop.f32.mrb[0].mxu0
    %v922 = vpop.f32.mrb[0].mxu0
    %923 = vdwg.mxu0
    %924 = vmatprep.subr.bf16.mxu0 %v222
    %925 = vmatpush1.bf16.msra.mxu0 %v221
    %926 = vmatprep.subr.bf16.mxu0 %v226
    %927 = vmatpush1.bf16.msra.mxu0 %v225
    %928 = vmatprep.subr.bf16.mxu0 %v230
    %929 = vmatpush1.bf16.msra.mxu0 %v229
    %930 = vmatprep.subr.bf16.mxu0 %v234
    %931 = vmatpush1.bf16.msra.mxu0 %v233
    %932 = vmatprep.subr.bf16.mxu0 %v238
    %933 = vmatpush1.bf16.msra.mxu0 %v237
    %934 = vmatprep.subr.bf16.mxu0 %v242
    %935 = vmatpush1.bf16.msra.mxu0 %v241
    %936 = vmatprep.subr.bf16.mxu0 %v246
    %937 = vmatpush1.bf16.msra.mxu0 %v245
    %938 = vmatprep.subr.bf16.mxu0 %v250
    %939 = vmatpush1.bf16.msra.mxu0 %v249
    %940 = vmatprep.subr.bf16.mxu0 0
    %941 = vmatpush1.bf16.msra.mxu0 0
    %942 = vmatprep.subr.bf16.mxu0 0
    %943 = vmatpush1.bf16.msra.mxu0 0
    %944 = vmatprep.subr.bf16.mxu0 0
    %945 = vmatpush1.bf16.msra.mxu0 0
    %946 = vmatprep.subr.bf16.mxu0 0
    %947 = vmatpush1.bf16.msra.mxu0 0
    %948 = vmatprep.subr.bf16.mxu0 0
    %949 = vmatpush1.bf16.msra.mxu0 0
    %950 = vmatprep.subr.bf16.mxu0 0
    %951 = vmatpush1.bf16.msra.mxu0 0
    %952 = vmatprep.subr.bf16.mxu0 0
    %953 = vmatpush1.bf16.msra.mxu0 0
    %954 = vmatprep.subr.bf16.mxu0 0
    %955 = vmatpush1.bf16.msra.mxu0 0
    %956 = vmatprep.mubr.bf16.mxu0 0
    %957 = vmatmul.mubr.bf16.gmra.mrb[0].mxu0 %v882
    %v958 = vpop.f32.mrb[0].mxu0
    %v959 = vadd.f32 0.0, %v958
    %v960 = vpop.f32.mrb[0].mxu0
    %v961 = vadd.f32 0.0, %v960
    %v962 = vpop.f32.mrb[0].mxu0
    %v963 = vpop.f32.mrb[0].mxu0
    %964 = vdwg.mxu0
    %v965 = vadd.f32 %v878, %v918
    %v966 = vadd.f32 %v879, %v920
    %v967 = vadd.f32 %v880, %v959
    %v968 = vadd.f32 %v881, %v961
    %v969 = vmul.f32 %v965, 0.5
    %v970 = vtanh.pop %v969
    %v971 = vmul.f32 %v970, 0.5
    %v972 = vadd.f32 %v971, 0.5
    %v973 = vmul.f32 %v966, 0.5
    %v974 = vtanh.pop %v973
    %v975 = vmul.f32 %v974, 0.5
    %v976 = vadd.f32 %v975, 0.5
    %v977 = vtanh.pop %v967
    %v978 = vmul.f32 %v968, 0.5
    %v979 = vtanh.pop %v978
    %v980 = vmul.f32 %v979, 0.5
    %v981 = vadd.f32 %v980, 0.5
    %v982 = vmul.f32 %v976, %v864
    %v983 = vmul.f32 %v972, %v977
    %v984 = vadd.f32 %v982, %v983
    %v985 = vtanh.pop %v984
    %v986 = vmul.f32 %v981, %v985
    %s987 = scalar_lea.vmem %s0, 48
    %v988 = vld [vmem:[%s987] sm:$0xff]
    %990 = vset.pattern.permute.xlu0 0
    %991 = vperm.xlu0 %990, %v988
    %v992 = vpop.permute.xlu0 %991
    %v994 = vmul.f32 %v992, %v44
    %v995 = vmul.f32 %v992, %v48
    %v996 = vmul.f32 %v992, %v52
    %v997 = vmul.f32 %v992, %v56
    %v998 = vadd.f32 %v994, %v70
    %v999 = vadd.f32 %v995, %v74
    %v1000 = vadd.f32 %v996, %v78
    %v1001 = vadd.f32 %v997, %v82
    %v1002 = vpack.c.bf16 %v986, %v986
    %1003 = vmatprep.subr.bf16.mxu0 %v220
    %1004 = vmatpush1.bf16.msra.mxu0 %v219
    %1005 = vmatprep.subr.bf16.mxu0 %v224
    %1006 = vmatpush1.bf16.msra.mxu0 %v223
    %1007 = vmatprep.subr.bf16.mxu0 %v228
    %1008 = vmatpush1.bf16.msra.mxu0 %v227
    %1009 = vmatprep.subr.bf16.mxu0 %v232
    %1010 = vmatpush1.bf16.msra.mxu0 %v231
    %1011 = vmatprep.subr.bf16.mxu0 %v236
    %1012 = vmatpush1.bf16.msra.mxu0 %v235
    %1013 = vmatprep.subr.bf16.mxu0 %v240
    %1014 = vmatpush1.bf16.msra.mxu0 %v239
    %1015 = vmatprep.subr.bf16.mxu0 %v244
    %1016 = vmatpush1.bf16.msra.mxu0 %v243
    %1017 = vmatprep.subr.bf16.mxu0 %v248
    %1018 = vmatpush1.bf16.msra.mxu0 %v247
    %1019 = vmatprep.subr.bf16.mxu0 0
    %1020 = vmatpush1.bf16.msra.mxu0 0
    %1021 = vmatprep.subr.bf16.mxu0 0
    %1022 = vmatpush1.bf16.msra.mxu0 0
    %1023 = vmatprep.subr.bf16.mxu0 0
    %1024 = vmatpush1.bf16.msra.mxu0 0
    %1025 = vmatprep.subr.bf16.mxu0 0
    %1026 = vmatpush1.bf16.msra.mxu0 0
    %1027 = vmatprep.subr.bf16.mxu0 0
    %1028 = vmatpush1.bf16.msra.mxu0 0
    %1029 = vmatprep.subr.bf16.mxu0 0
    %1030 = vmatpush1.bf16.msra.mxu0 0
    %1031 = vmatprep.subr.bf16.mxu0 0
    %1032 = vmatpush1.bf16.msra.mxu0 0
    %1033 = vmatprep.subr.bf16.mxu0 0
    %1034 = vmatpush1.bf16.msra.mxu0 0
    %1035 = vmatprep.mubr.bf16.mxu0 0
    %1036 = vmatmul.mubr.bf16.gmra.mrb[0].mxu0 %v1002
    %v1037 = vpop.f32.mrb[0].mxu0
    %v1038 = vadd.f32 0.0, %v1037
    %v1039 = vpop.f32.mrb[0].mxu0
    %v1040 = vadd.f32 0.0, %v1039
    %v1041 = vpop.f32.mrb[0].mxu0
    %v1042 = vpop.f32.mrb[0].mxu0
    %1043 = vdwg.mxu0
    %1044 = vmatprep.subr.bf16.mxu0 %v222
    %1045 = vmatpush1.bf16.msra.mxu0 %v221
    %1046 = vmatprep.subr.bf16.mxu0 %v226
    %1047 = vmatpush1.bf16.msra.mxu0 %v225
    %1048 = vmatprep.subr.bf16.mxu0 %v230
    %1049 = vmatpush1.bf16.msra.mxu0 %v229
    %1050 = vmatprep.subr.bf16.mxu0 %v234
    %1051 = vmatpush1.bf16.msra.mxu0 %v233
    %1052 = vmatprep.subr.bf16.mxu0 %v238
    %1053 = vmatpush1.bf16.msra.mxu0 %v237
    %1054 = vmatprep.subr.bf16.mxu0 %v242
    %1055 = vmatpush1.bf16.msra.mxu0 %v241
    %1056 = vmatprep.subr.bf16.mxu0 %v246
    %1057 = vmatpush1.bf16.msra.mxu0 %v245
    %1058 = vmatprep.subr.bf16.mxu0 %v250
    %1059 = vmatpush1.bf16.msra.mxu0 %v249
    %1060 = vmatprep.subr.bf16.mxu0 0
    %1061 = vmatpush1.bf16.msra.mxu0 0
    %1062 = vmatprep.subr.bf16.mxu0 0
    %1063 = vmatpush1.bf16.msra.mxu0 0
    %1064 = vmatprep.subr.bf16.mxu0 0
    %1065 = vmatpush1.bf16.msra.mxu0 0
    %1066 = vmatprep.subr.bf16.mxu0 0
    %1067 = vmatpush1.bf16.msra.mxu0 0
    %1068 = vmatprep.subr.bf16.mxu0 0
    %1069 = vmatpush1.bf16.msra.mxu0 0
    %1070 = vmatprep.subr.bf16.mxu0 0
    %1071 = vmatpush1.bf16.msra.mxu0 0
    %1072 = vmatprep.subr.bf16.mxu0 0
    %1073 = vmatpush1.bf16.msra.mxu0 0
    %1074 = vmatprep.subr.bf16.mxu0 0
    %1075 = vmatpush1.bf16.msra.mxu0 0
    %1076 = vmatprep.mubr.bf16.mxu0 0
    %1077 = vmatmul.mubr.bf16.gmra.mrb[0].mxu0 %v1002
    %v1078 = vpop.f32.mrb[0].mxu0
    %v1079 = vadd.f32 0.0, %v1078
    %v1080 = vpop.f32.mrb[0].mxu0
    %v1081 = vadd.f32 0.0, %v1080
    %v1082 = vpop.f32.mrb[0].mxu0
    %v1083 = vpop.f32.mrb[0].mxu0
    %1084 = vdwg.mxu0
    %v1085 = vadd.f32 %v998, %v1038
    %v1086 = vadd.f32 %v999, %v1040
    %v1087 = vadd.f32 %v1000, %v1079
    %v1088 = vadd.f32 %v1001, %v1081
    %v1089 = vmul.f32 %v1085, 0.5
    %v1090 = vtanh.pop %v1089
    %v1091 = vmul.f32 %v1090, 0.5
    %v1092 = vadd.f32 %v1091, 0.5
    %v1093 = vmul.f32 %v1086, 0.5
    %v1094 = vtanh.pop %v1093
    %v1095 = vmul.f32 %v1094, 0.5
    %v1096 = vadd.f32 %v1095, 0.5
    %v1097 = vtanh.pop %v1087
    %v1098 = vmul.f32 %v1088, 0.5
    %v1099 = vtanh.pop %v1098
    %v1100 = vmul.f32 %v1099, 0.5
    %v1101 = vadd.f32 %v1100, 0.5
    %v1102 = vmul.f32 %v1096, %v984
    %v1103 = vmul.f32 %v1092, %v1097
    %v1104 = vadd.f32 %v1102, %v1103
    %v1105 = vtanh.pop %v1104
    %v1106 = vmul.f32 %v1101, %v1105
    %s1107 = scalar_lea.vmem %s0, 56
    %v1108 = vld [vmem:[%s1107] sm:$0xff]
    %1110 = vset.pattern.permute.xlu0 0
    %1111 = vperm.xlu0 %1110, %v1108
    %v1112 = vpop.permute.xlu0 %1111
    %v1114 = vmul.f32 %v1112, %v44
    %v1115 = vmul.f32 %v1112, %v48
    %v1116 = vmul.f32 %v1112, %v52
    %v1117 = vmul.f32 %v1112, %v56
    %v1118 = vadd.f32 %v1114, %v70
    %v1119 = vadd.f32 %v1115, %v74
    %v1120 = vadd.f32 %v1116, %v78
    %v1121 = vadd.f32 %v1117, %v82
    %v1122 = vpack.c.bf16 %v1106, %v1106
    %1123 = vmatprep.subr.bf16.mxu0 %v220
    %1124 = vmatpush1.bf16.msra.mxu0 %v219
    %1125 = vmatprep.subr.bf16.mxu0 %v224
    %1126 = vmatpush1.bf16.msra.mxu0 %v223
    %1127 = vmatprep.subr.bf16.mxu0 %v228
    %1128 = vmatpush1.bf16.msra.mxu0 %v227
    %1129 = vmatprep.subr.bf16.mxu0 %v232
    %1130 = vmatpush1.bf16.msra.mxu0 %v231
    %1131 = vmatprep.subr.bf16.mxu0 %v236
    %1132 = vmatpush1.bf16.msra.mxu0 %v235
    %1133 = vmatprep.subr.bf16.mxu0 %v240
    %1134 = vmatpush1.bf16.msra.mxu0 %v239
    %1135 = vmatprep.subr.bf16.mxu0 %v244
    %1136 = vmatpush1.bf16.msra.mxu0 %v243
    %1137 = vmatprep.subr.bf16.mxu0 %v248
    %1138 = vmatpush1.bf16.msra.mxu0 %v247
    %1139 = vmatprep.subr.bf16.mxu0 0
    %1140 = vmatpush1.bf16.msra.mxu0 0
    %1141 = vmatprep.subr.bf16.mxu0 0
    %1142 = vmatpush1.bf16.msra.mxu0 0
    %1143 = vmatprep.subr.bf16.mxu0 0
    %1144 = vmatpush1.bf16.msra.mxu0 0
    %1145 = vmatprep.subr.bf16.mxu0 0
    %1146 = vmatpush1.bf16.msra.mxu0 0
    %1147 = vmatprep.subr.bf16.mxu0 0
    %1148 = vmatpush1.bf16.msra.mxu0 0
    %1149 = vmatprep.subr.bf16.mxu0 0
    %1150 = vmatpush1.bf16.msra.mxu0 0
    %1151 = vmatprep.subr.bf16.mxu0 0
    %1152 = vmatpush1.bf16.msra.mxu0 0
    %1153 = vmatprep.subr.bf16.mxu0 0
    %1154 = vmatpush1.bf16.msra.mxu0 0
    %1155 = vmatprep.mubr.bf16.mxu0 0
    %1156 = vmatmul.mubr.bf16.gmra.mrb[0].mxu0 %v1122
    %v1157 = vpop.f32.mrb[0].mxu0
    %v1158 = vadd.f32 0.0, %v1157
    %v1159 = vpop.f32.mrb[0].mxu0
    %v1160 = vadd.f32 0.0, %v1159
    %v1161 = vpop.f32.mrb[0].mxu0
    %v1162 = vpop.f32.mrb[0].mxu0
    %1163 = vdwg.mxu0
    %1164 = vmatprep.subr.bf16.mxu0 %v222
    %1165 = vmatpush1.bf16.msra.mxu0 %v221
    %1166 = vmatprep.subr.bf16.mxu0 %v226
    %1167 = vmatpush1.bf16.msra.mxu0 %v225
    %1168 = vmatprep.subr.bf16.mxu0 %v230
    %1169 = vmatpush1.bf16.msra.mxu0 %v229
    %1170 = vmatprep.subr.bf16.mxu0 %v234
    %1171 = vmatpush1.bf16.msra.mxu0 %v233
    %1172 = vmatprep.subr.bf16.mxu0 %v238
    %1173 = vmatpush1.bf16.msra.mxu0 %v237
    %1174 = vmatprep.subr.bf16.mxu0 %v242
    %1175 = vmatpush1.bf16.msra.mxu0 %v241
    %1176 = vmatprep.subr.bf16.mxu0 %v246
    %1177 = vmatpush1.bf16.msra.mxu0 %v245
    %1178 = vmatprep.subr.bf16.mxu0 %v250
    %1179 = vmatpush1.bf16.msra.mxu0 %v249
    %1180 = vmatprep.subr.bf16.mxu0 0
    %1181 = vmatpush1.bf16.msra.mxu0 0
    %1182 = vmatprep.subr.bf16.mxu0 0
    %1183 = vmatpush1.bf16.msra.mxu0 0
    %1184 = vmatprep.subr.bf16.mxu0 0
    %1185 = vmatpush1.bf16.msra.mxu0 0
    %1186 = vmatprep.subr.bf16.mxu0 0
    %1187 = vmatpush1.bf16.msra.mxu0 0
    %1188 = vmatprep.subr.bf16.mxu0 0
    %1189 = vmatpush1.bf16.msra.mxu0 0
    %1190 = vmatprep.subr.bf16.mxu0 0
    %1191 = vmatpush1.bf16.msra.mxu0 0
    %1192 = vmatprep.subr.bf16.mxu0 0
    %1193 = vmatpush1.bf16.msra.mxu0 0
    %1194 = vmatprep.subr.bf16.mxu0 0
    %1195 = vmatpush1.bf16.msra.mxu0 0
    %1196 = vmatprep.mubr.bf16.mxu0 0
    %1197 = vmatmul.mubr.bf16.gmra.mrb[0].mxu0 %v1122
    %v1198 = vpop.f32.mrb[0].mxu0
    %v1199 = vadd.f32 0.0, %v1198
    %v1200 = vpop.f32.mrb[0].mxu0
    %v1201 = vadd.f32 0.0, %v1200
    %v1202 = vpop.f32.mrb[0].mxu0
    %v1203 = vpop.f32.mrb[0].mxu0
    %1204 = vdwg.mxu0
    %v1205 = vadd.f32 %v1118, %v1158
    %v1206 = vadd.f32 %v1119, %v1160
    %v1207 = vadd.f32 %v1120, %v1199
    %v1208 = vadd.f32 %v1121, %v1201
    %v1209 = vmul.f32 %v1205, 0.5
    %v1210 = vtanh.pop %v1209
    %v1211 = vmul.f32 %v1210, 0.5
    %v1212 = vadd.f32 %v1211, 0.5
    %v1213 = vmul.f32 %v1206, 0.5
    %v1214 = vtanh.pop %v1213
    %v1215 = vmul.f32 %v1214, 0.5
    %v1216 = vadd.f32 %v1215, 0.5
    %v1217 = vtanh.pop %v1207
    %v1218 = vmul.f32 %v1208, 0.5
    %v1219 = vtanh.pop %v1218
    %v1220 = vmul.f32 %v1219, 0.5
    %v1221 = vadd.f32 %v1220, 0.5
    %v1222 = vmul.f32 %v1216, %v1104
    %v1223 = vmul.f32 %v1212, %v1217
    %v1224 = vadd.f32 %v1222, %v1223
    %v1225 = vtanh.pop %v1224
    %v1226 = vmul.f32 %v1221, %v1225
    %1227 = vst [vmem:[#allocation5] sm:$0xff] %v1226
    // Predicated region
    $region22: #{tpu_custom_call.1} parent=1 // pred_check
      _
    $region23: #{tpu_custom_call.1} parent=1 // pred_check_branch
      %1229 = sbr.rel (0) target = $region25
    $region24: #{tpu_custom_call.1} parent=1 // pred_region
      %s1231 = ssub.s32 128, 128
      %1232 = vsyncadd [#allocation4], %s1231
      %s1234 = sshll.u32 [#allocation5], 4
      %s1235 = int_to_ptr.vmem [resolvable:$true] %s1234
      %1237 = dma.vmem_to_hbm [thread:$0]  %s1235, 128, %s4, [#allocation4]
    $region25: #{tpu_custom_call.1} parent=1 // pred_fallthru
      _
    // Predicated region
    $region26: #{tpu_custom_call.1} parent=1 // pred_check
      _
    $region27: #{tpu_custom_call.1} parent=1 // pred_check_branch
      %1239 = sbr.rel (0) target = $region29
    $region28: #{tpu_custom_call.1} parent=1 // pred_region
      %1240 = dma.done [#allocation4], 128
    $region29: #{tpu_custom_call.1} parent=1 // pred_fallthru
      _
    %1241 = vsyncpa [#allocation3], 1
    %1242 = vsyncpa [#allocation4], 1

</llo_original>
